<compile_context>
chip_gen: v6e
topology: v6e:2x2x1
jax: 0.10.0
libtpu: 0.0.40
codegen_flags: <defaults>
</compile_context>

<pallas_src>
import numpy as np

import jax
import jax.numpy as jnp
from jax.experimental import pallas as pl
from jax.experimental.pallas import tpu as pltpu

EMBED_DIM = 32     # D ; 4*D = 128 -> the gate vector spans exactly one vreg lane dim
C_MAX = 4          # max children per node supported by one compile
N_MAX = 8          # max nodes per tree supported by one compile


# ------------------------------- Pallas kernel ------------------------------ #

def tree_lstm_kernel(cc_ref, ci_ref, di_ref,                     # SMEM schedule (scalar prefetch)
                     emb_ref, depw_ref, depb_ref,                # VMEM: embeddings + dep tables
                     wih_ref, whh_ref, b_ref,                    # VMEM: LSTM weights (pre-transposed)
                     out_ref,                                    # VMEM output (1, D)
                     state_ref):                                 # VMEM scratch (N_MAX, 1, D) cell states
    n = pl.program_id(0)
    D = out_ref.shape[1]

    @pl.when(n == 0)
    def _init():
        state_ref[...] = jnp.zeros_like(state_ref)

    num_children = cc_ref[n]                                     # int32 scalar from SMEM
    x = emb_ref[0].astype(jnp.float32)                           # (1, D) node embedding

    # Dependency-specific child projections, gathered from VMEM-resident tables.
    # z_c = c_child @ dep_W_t[dep] + dep_b[dep]   (dep_W_t pre-transposed to (in, out))
    z_rows = []
    for c in range(C_MAX):                                       # static unroll, C_MAX tiny
        child = ci_ref[n, c]
        dep = di_ref[n, c]
        h_child = state_ref[child]                               # (1, D)
        w = depw_ref[dep]                                        # (D, D)
        b_dep = depb_ref[dep]                                    # (1, D)
        z_rows.append(jnp.dot(h_child, w, preferred_element_type=jnp.float32) + b_dep)

    # Candidate timestep inputs: C_MAX child rows then the node embedding (children first,
    # parent last, matching torch.stack(z_cs + [x])).
    seq = jnp.concatenate(z_rows + [x], axis=0)                  # (C_MAX + 1, D)

    # Hoisted input projection: ONE matmul for every candidate timestep.
    # Gate column order is (i, f, o, g) — permuted offline.
    gates_x = (jnp.dot(seq, wih_ref[...], preferred_element_type=jnp.float32)
               + b_ref[...])                                     # (C_MAX + 1, 4D)
    x_gates = gates_x[C_MAX:C_MAX + 1, :]                        # gates of the node embedding

    whh = whh_ref[...]                                           # (D, 4D)
    h = jnp.zeros((1, D), jnp.float32)
    cell = jnp.zeros((1, D), jnp.float32)

    for t in range(C_MAX + 1):                                   # static unroll, T_MAX tiny
        # timestep t feeds: child t (t < num_children), the node embedding (t == num_children),
        # or nothing (padding, masked below).
        if t < C_MAX:
            gx = jnp.where(t == num_children, x_gates, gates_x[t:t + 1, :])
        else:
            gx = x_gates
        gates = gx + jnp.dot(h, whh, preferred_element_type=jnp.float32)   # (1, 4D)

        sig = jax.nn.sigmoid(gates[:, 0:3 * D])                  # i, f, o with one sigmoid
        i_g = sig[:, 0:D]
        f_g = sig[:, D:2 * D]
        o_g = sig[:, 2 * D:3 * D]
        g_g = jnp.tanh(gates[:, 3 * D:4 * D])

        c_new = f_g * cell + i_g * g_g
        h_new = o_g * jnp.tanh(c_new)

        valid = t <= num_children                                # real step for this node?
        cell = jnp.where(valid, c_new, cell)
        h = jnp.where(valid, h_new, h)

    state_ref[n] = cell                                          # store this node's c_T
    out_ref[...] = cell.astype(out_ref.dtype)                    # last (root) write wins


# ------------------------------ pallas_call wrapper -------------------------- #

def make_tree_lstm(D, P):
    full2 = lambda n, cc, ci, di: (0, 0)
    full3 = lambda n, cc, ci, di: (0, 0, 0)

    grid_spec = pltpu.PrefetchScalarGridSpec(
        num_scalar_prefetch=3,                                   # child_count, child_idx, dep_idx
        grid=(N_MAX,),
        in_specs=[
            pl.BlockSpec((1, 1, D), lambda n, cc, ci, di: (n, 0, 0)),   # embeddings (N_MAX, 1, D)
            pl.BlockSpec((P, D, D), full3),                              # dep_W_t   (P, D, D)
            pl.BlockSpec((P, 1, D), full3),                              # dep_b     (P, 1, D)
            pl.BlockSpec((D, 4 * D), full2),                             # W_ih^T    (D, 4D)
            pl.BlockSpec((D, 4 * D), full2),                             # W_hh^T    (D, 4D)
            pl.BlockSpec((1, 4 * D), full2),                             # bias      (1, 4D)
        ],
        out_specs=pl.BlockSpec((1, D), full2),
        scratch_shapes=[pltpu.VMEM((N_MAX, 1, D), jnp.float32)],         # per-node c_T table
    )

    call = pl.pallas_call(
        tree_lstm_kernel,
        out_shape=jax.ShapeDtypeStruct((1, D), jnp.float32),
        grid_spec=grid_spec,
        compiler_params=pltpu.CompilerParams(
            dimension_semantics=("arbitrary",),                  # sequential tree dependency
            vmem_limit_bytes=8 * 1024 * 1024,
        ),
    )

    @jax.jit
    def fwd(child_count, child_idx, dep_idx, emb, dep_w_t, dep_b, w_ih_t, w_hh_t, bias):
        return call(child_count, child_idx, dep_idx,
                    emb, dep_w_t, dep_b, w_ih_t, w_hh_t, bias)

    return fwd


# ------------------------------ Model / host glue ---------------------------- #

class Node:
    """Minimal dependency-tree node (stands in for the torch module's input)."""

    def __init__(self, embedding, dep=None, children=()):
        self.embedding = embedding        # numpy array, shape (D,)
        self.dep = dep                    # dependency label of edge to parent
        self.children = list(children)


def init_params(key, embedding_dim, num_params):
    """Deterministic synthetic parameters (PyTorch conventions: W (out,in), gates i,f,g,o)."""
    D = embedding_dim
    bound = 1.0 / float(D) ** 0.5
    ks = jax.random.split(key, 6)
    return {
        "dep_W": jax.random.uniform(ks[0], (num_params, D, D), jnp.float32, -bound, bound),
        "dep_b": jax.random.uniform(ks[1], (num_params, D), jnp.float32, -bound, bound),
        "w_ih": jax.random.uniform(ks[2], (4 * D, D), jnp.float32, -bound, bound),
        "w_hh": jax.random.uniform(ks[3], (4 * D, D), jnp.float32, -bound, bound),
        "b_ih": jax.random.uniform(ks[4], (4 * D,), jnp.float32, -bound, bound),
        "b_hh": jax.random.uniform(ks[5], (4 * D,), jnp.float32, -bound, bound),
    }


def prep_kernel_params(p, D):
    """Pre-transpose weights and permute gate order (i,f,g,o) -> (i,f,o,g) once, off the hot path."""
    perm = np.concatenate([np.arange(0, 2 * D),        # i, f
                           np.arange(3 * D, 4 * D),    # o
                           np.arange(2 * D, 3 * D)])   # g
    dep_w_t = jnp.transpose(p["dep_W"], (0, 2, 1))                 # (P, D_in, D_out)
    dep_b = p["dep_b"][:, None, :]                                 # (P, 1, D)
    w_ih_t = jnp.transpose(p["w_ih"][perm], (1, 0))                # (D, 4D), permuted columns
    w_hh_t = jnp.transpose(p["w_hh"][perm], (1, 0))                # (D, 4D)
    bias = (p["b_ih"] + p["b_hh"])[perm][None, :]                  # (1, 4D)
    return dep_w_t, dep_b, w_ih_t, w_hh_t, bias


def build_schedule(root, dependency_map, D):
    """Topologically sort the tree (children before parents, root last) and pad to N_MAX/C_MAX."""
    order = []

    def post(node):
        for c in node.children:
            post(c)
        order.append(node)

    post(root)
    n_real = len(order)
    assert n_real <= N_MAX, f"tree has {n_real} nodes > N_MAX={N_MAX}"
    assert all(len(nd.children) <= C_MAX for nd in order), f"node exceeds C_MAX={C_MAX}"

    pad = N_MAX - n_real                     # dummy leaf nodes occupy the leading slots
    slot = {id(nd): pad + i for i, nd in enumerate(order)}   # root -> slot N_MAX - 1 (last)

    child_count = np.zeros((N_MAX,), np.int32)
    child_idx = np.zeros((N_MAX, C_MAX), np.int32)
    dep_idx = np.zeros((N_MAX, C_MAX), np.int32)
    emb = np.zeros((N_MAX, 1, D), np.float32)
    for nd in order:
        s = slot[id(nd)]
        emb[s, 0, :] = np.asarray(nd.embedding, np.float32)
        child_count[s] = len(nd.children)
        for c, ch in enumerate(nd.children):
            child_idx[s, c] = slot[id(ch)]
            dep_idx[s, c] = dependency_map[ch.dep]
    return (jnp.asarray(child_count), jnp.asarray(child_idx),
            jnp.asarray(dep_idx), jnp.asarray(emb))


def reference_forward(root, params, dependency_map, D):
    """Pure numpy f32 reference mirroring DependencyEncoder3.recur (returns final cell state)."""
    dep_W = np.asarray(params["dep_W"], np.float32)
    dep_b = np.asarray(params["dep_b"], np.float32)
    w_ih = np.asarray(params["w_ih"], np.float32)
    w_hh = np.asarray(params["w_hh"], np.float32)
    b = np.asarray(params["b_ih"] + params["b_hh"], np.float32)

    def sigmoid(v):
        return 1.0 / (1.0 + np.exp(-v))

    def lstm_last_cell(seq):                                     # seq (T, D)
        h = np.zeros((D,), np.float32)
        c = np.zeros((D,), np.float32)
        for t in range(seq.shape[0]):
            g = w_ih @ seq[t] + w_hh @ h + b                     # gate order i, f, g, o
            i = sigmoid(g[0:D])
            f = sigmoid(g[D:2 * D])
            gg = np.tanh(g[2 * D:3 * D])
            o = sigmoid(g[3 * D:4 * D])
            c = f * c + i * gg
            h = o * np.tanh(c)
        return c

    def recur(node):
        x = np.asarray(node.embedding, np.float32)
        rows = []
        for ch in node.children:
            d = dependency_map[ch.dep]
            rows.append(dep_W[d] @ recur(ch) + dep_b[d])
        rows.append(x)
        return lstm_last_cell(np.stack(rows, axis=0))

    return recur(root).reshape(1, D)


# ----------------------------------- main ------------------------------------ #

if __name__ == "__main__":
    D = EMBED_DIM
    dependency_map = {"nsubj": 0, "dobj": 1, "det": 2, "amod": 3}
    P = max(dependency_map.values()) + 1

    key = jax.random.PRNGKey(0)
    k_params, k_emb = jax.random.split(key)
    params = init_params(k_params, D, P)
    dep_w_t, dep_b3, w_ih_t, w_hh_t, bias = prep_kernel_params(params, D)

    # Deterministic node embeddings for a small dependency tree.
    embs = np.asarray(jax.random.normal(k_emb, (6, D), jnp.float32))

    # Tree:
    # root
    #  |- A (nsubj)
    #  |    `- leaf (det)
    #  `- B (dobj)
    #       |- leaf (det)
    #       `- leaf (amod)
    leaf_a = Node(embs[2], dep="det")
    node_a = Node(embs[1], dep="nsubj", children=[leaf_a])
    leaf_b1 = Node(embs[4], dep="det")
    leaf_b2 = Node(embs[5], dep="amod")
    node_b = Node(embs[3], dep="dobj", children=[leaf_b1, leaf_b2])
    root = Node(embs[0], children=[node_a, node_b])

    child_count, child_idx, dep_idx, emb = build_schedule(root, dependency_map, D)

    fwd = make_tree_lstm(D, P)
    out = fwd(child_count, child_idx, dep_idx, emb,
              dep_w_t, dep_b3, w_ih_t, w_hh_t, bias)
    out = jax.block_until_ready(out)

    assert out.shape == (1, D), out.shape
    assert bool(jnp.all(jnp.isfinite(out)))

    ref = reference_forward(root, params, dependency_map, D)
    np.testing.assert_allclose(np.asarray(out), ref, rtol=2e-3, atol=2e-3)

    print("KERNEL_OK")
</pallas_src>

<mosaic_0001>
module attributes {stable_mosaic.version = 11 : i64} {
  func.func @tree_lstm_kernel(%arg0: i32, %arg1: memref<8xi32, #tpu.memory_space<smem>>, %arg2: memref<8x4xi32, #tpu.memory_space<smem>>, %arg3: memref<8x4xi32, #tpu.memory_space<smem>>, %arg4: memref<1x1x32xf32, #tpu.memory_space<vmem>>, %arg5: memref<4x32x32xf32, #tpu.memory_space<vmem>>, %arg6: memref<4x1x32xf32, #tpu.memory_space<vmem>>, %arg7: memref<32x128xf32, #tpu.memory_space<vmem>>, %arg8: memref<32x128xf32, #tpu.memory_space<vmem>>, %arg9: memref<1x128xf32, #tpu.memory_space<vmem>>, %arg10: memref<1x32xf32, #tpu.memory_space<vmem>>, %arg11: memref<8x1x32xf32, #tpu.memory_space<vmem>>) attributes {dimension_semantics = [#tpu.dimension_semantics<arbitrary>], iteration_bounds = array<i64: 8>, scalar_prefetch = 3 : i64, scratch_operands = 1 : i64, tpu.core_type = #tpu.core_type<tc>, window_params = [{transform_indices = @transform_0, window_bounds = array<i64: 1, 1, 32>}, {pipeline_mode = #tpu.pipeline_mode<synchronous>, transform_indices = @transform_1, window_bounds = array<i64: 4, 32, 32>}, {pipeline_mode = #tpu.pipeline_mode<synchronous>, transform_indices = @transform_2, window_bounds = array<i64: 4, 1, 32>}, {pipeline_mode = #tpu.pipeline_mode<synchronous>, transform_indices = @transform_3, window_bounds = array<i64: 32, 128>}, {pipeline_mode = #tpu.pipeline_mode<synchronous>, transform_indices = @transform_4, window_bounds = array<i64: 32, 128>}, {pipeline_mode = #tpu.pipeline_mode<synchronous>, transform_indices = @transform_5, window_bounds = array<i64: 1, 128>}, {pipeline_mode = #tpu.pipeline_mode<synchronous>, transform_indices = @transform_6, window_bounds = array<i64: 1, 32>}]} {
    %c0_i32 = arith.constant 0 : i32
    %0 = arith.cmpi eq, %arg0, %c0_i32 : i32
    %1 = arith.extui %0 : i1 to i32
    %c0_i32_0 = arith.constant 0 : i32
    %2 = arith.cmpi ne, %1, %c0_i32_0 : i32
    scf.if %2 {
      %cst_63 = arith.constant 0.000000e+00 : f32
      %195 = vector.broadcast %cst_63 : f32 to vector<8x1x32xf32>
      %c0_64 = arith.constant 0 : index
      %c0_65 = arith.constant 0 : index
      %c0_66 = arith.constant 0 : index
      %196 = vector.load %arg11[%c0_64, %c0_65, %c0_66] : memref<8x1x32xf32, #tpu.memory_space<vmem>>, vector<8x1x32xf32>
      tpu.vector_store %arg11[%c0_64, %c0_65, %c0_66], %195 {strides = array<i32>} : memref<8x1x32xf32, #tpu.memory_space<vmem>>, vector<8x1x32xf32>,
    } else {
    }
    %3 = arith.index_cast %arg0 : i32 to index
    %4 = memref.load %arg1[%3] : memref<8xi32, #tpu.memory_space<smem>>
    %c0 = arith.constant 0 : index
    %c0_1 = arith.constant 0 : index
    %c0_2 = arith.constant 0 : index
    %5 = vector.load %arg4[%c0, %c0_1, %c0_2] : memref<1x1x32xf32, #tpu.memory_space<vmem>>, vector<1x1x32xf32>
    %6 = vector.shape_cast %5 : vector<1x1x32xf32> to vector<1x32xf32>
    %7 = arith.index_cast %arg0 : i32 to index
    %c0_3 = arith.constant 0 : index
    %8 = memref.load %arg2[%7, %c0_3] : memref<8x4xi32, #tpu.memory_space<smem>>
    %9 = arith.index_cast %arg0 : i32 to index
    %c0_4 = arith.constant 0 : index
    %10 = memref.load %arg3[%9, %c0_4] : memref<8x4xi32, #tpu.memory_space<smem>>
    %11 = arith.index_cast %8 : i32 to index
    %c0_5 = arith.constant 0 : index
    %c0_6 = arith.constant 0 : index
    %12 = vector.load %arg11[%11, %c0_5, %c0_6] : memref<8x1x32xf32, #tpu.memory_space<vmem>>, vector<1x1x32xf32>
    %13 = vector.shape_cast %12 : vector<1x1x32xf32> to vector<1x32xf32>
    %14 = arith.index_cast %10 : i32 to index
    %c0_7 = arith.constant 0 : index
    %c0_8 = arith.constant 0 : index
    %15 = vector.load %arg5[%14, %c0_7, %c0_8] : memref<4x32x32xf32, #tpu.memory_space<vmem>>, vector<1x32x32xf32>
    %16 = vector.shape_cast %15 : vector<1x32x32xf32> to vector<32x32xf32>
    %17 = arith.index_cast %10 : i32 to index
    %c0_9 = arith.constant 0 : index
    %c0_10 = arith.constant 0 : index
    %18 = vector.load %arg6[%17, %c0_9, %c0_10] : memref<4x1x32xf32, #tpu.memory_space<vmem>>, vector<1x1x32xf32>
    %19 = vector.shape_cast %18 : vector<1x1x32xf32> to vector<1x32xf32>
    %cst = arith.constant dense<0.000000e+00> : vector<1x32xf32>
    %20 = tpu.matmul %13, %16, %cst {dimension_numbers = #tpu.dot_dimension_numbers<[1], [0], [0], [1], [0, 0, 1, 1], [], []>} : vector<1x32xf32>, vector<32x32xf32>, vector<1x32xf32> -> vector<1x32xf32>
    %21 = arith.addf %20, %19 : vector<1x32xf32>
    %22 = arith.index_cast %arg0 : i32 to index
    %c1 = arith.constant 1 : index
    %23 = memref.load %arg2[%22, %c1] : memref<8x4xi32, #tpu.memory_space<smem>>
    %24 = arith.index_cast %arg0 : i32 to index
    %c1_11 = arith.constant 1 : index
    %25 = memref.load %arg3[%24, %c1_11] : memref<8x4xi32, #tpu.memory_space<smem>>
    %26 = arith.index_cast %23 : i32 to index
    %c0_12 = arith.constant 0 : index
    %c0_13 = arith.constant 0 : index
    %27 = vector.load %arg11[%26, %c0_12, %c0_13] : memref<8x1x32xf32, #tpu.memory_space<vmem>>, vector<1x1x32xf32>
    %28 = vector.shape_cast %27 : vector<1x1x32xf32> to vector<1x32xf32>
    %29 = arith.index_cast %25 : i32 to index
    %c0_14 = arith.constant 0 : index
    %c0_15 = arith.constant 0 : index
    %30 = vector.load %arg5[%29, %c0_14, %c0_15] : memref<4x32x32xf32, #tpu.memory_space<vmem>>, vector<1x32x32xf32>
    %31 = vector.shape_cast %30 : vector<1x32x32xf32> to vector<32x32xf32>
    %32 = arith.index_cast %25 : i32 to index
    %c0_16 = arith.constant 0 : index
    %c0_17 = arith.constant 0 : index
    %33 = vector.load %arg6[%32, %c0_16, %c0_17] : memref<4x1x32xf32, #tpu.memory_space<vmem>>, vector<1x1x32xf32>
    %34 = vector.shape_cast %33 : vector<1x1x32xf32> to vector<1x32xf32>
    %cst_18 = arith.constant dense<0.000000e+00> : vector<1x32xf32>
    %35 = tpu.matmul %28, %31, %cst_18 {dimension_numbers = #tpu.dot_dimension_numbers<[1], [0], [0], [1], [0, 0, 1, 1], [], []>} : vector<1x32xf32>, vector<32x32xf32>, vector<1x32xf32> -> vector<1x32xf32>
    %36 = arith.addf %35, %34 : vector<1x32xf32>
    %37 = arith.index_cast %arg0 : i32 to index
    %c2 = arith.constant 2 : index
    %38 = memref.load %arg2[%37, %c2] : memref<8x4xi32, #tpu.memory_space<smem>>
    %39 = arith.index_cast %arg0 : i32 to index
    %c2_19 = arith.constant 2 : index
    %40 = memref.load %arg3[%39, %c2_19] : memref<8x4xi32, #tpu.memory_space<smem>>
    %41 = arith.index_cast %38 : i32 to index
    %c0_20 = arith.constant 0 : index
    %c0_21 = arith.constant 0 : index
    %42 = vector.load %arg11[%41, %c0_20, %c0_21] : memref<8x1x32xf32, #tpu.memory_space<vmem>>, vector<1x1x32xf32>
    %43 = vector.shape_cast %42 : vector<1x1x32xf32> to vector<1x32xf32>
    %44 = arith.index_cast %40 : i32 to index
    %c0_22 = arith.constant 0 : index
    %c0_23 = arith.constant 0 : index
    %45 = vector.load %arg5[%44, %c0_22, %c0_23] : memref<4x32x32xf32, #tpu.memory_space<vmem>>, vector<1x32x32xf32>
    %46 = vector.shape_cast %45 : vector<1x32x32xf32> to vector<32x32xf32>
    %47 = arith.index_cast %40 : i32 to index
    %c0_24 = arith.constant 0 : index
    %c0_25 = arith.constant 0 : index
    %48 = vector.load %arg6[%47, %c0_24, %c0_25] : memref<4x1x32xf32, #tpu.memory_space<vmem>>, vector<1x1x32xf32>
    %49 = vector.shape_cast %48 : vector<1x1x32xf32> to vector<1x32xf32>
    %cst_26 = arith.constant dense<0.000000e+00> : vector<1x32xf32>
    %50 = tpu.matmul %43, %46, %cst_26 {dimension_numbers = #tpu.dot_dimension_numbers<[1], [0], [0], [1], [0, 0, 1, 1], [], []>} : vector<1x32xf32>, vector<32x32xf32>, vector<1x32xf32> -> vector<1x32xf32>
    %51 = arith.addf %50, %49 : vector<1x32xf32>
    %52 = arith.index_cast %arg0 : i32 to index
    %c3 = arith.constant 3 : index
    %53 = memref.load %arg2[%52, %c3] : memref<8x4xi32, #tpu.memory_space<smem>>
    %54 = arith.index_cast %arg0 : i32 to index
    %c3_27 = arith.constant 3 : index
    %55 = memref.load %arg3[%54, %c3_27] : memref<8x4xi32, #tpu.memory_space<smem>>
    %56 = arith.index_cast %53 : i32 to index
    %c0_28 = arith.constant 0 : index
    %c0_29 = arith.constant 0 : index
    %57 = vector.load %arg11[%56, %c0_28, %c0_29] : memref<8x1x32xf32, #tpu.memory_space<vmem>>, vector<1x1x32xf32>
    %58 = vector.shape_cast %57 : vector<1x1x32xf32> to vector<1x32xf32>
    %59 = arith.index_cast %55 : i32 to index
    %c0_30 = arith.constant 0 : index
    %c0_31 = arith.constant 0 : index
    %60 = vector.load %arg5[%59, %c0_30, %c0_31] : memref<4x32x32xf32, #tpu.memory_space<vmem>>, vector<1x32x32xf32>
    %61 = vector.shape_cast %60 : vector<1x32x32xf32> to vector<32x32xf32>
    %62 = arith.index_cast %55 : i32 to index
    %c0_32 = arith.constant 0 : index
    %c0_33 = arith.constant 0 : index
    %63 = vector.load %arg6[%62, %c0_32, %c0_33] : memref<4x1x32xf32, #tpu.memory_space<vmem>>, vector<1x1x32xf32>
    %64 = vector.shape_cast %63 : vector<1x1x32xf32> to vector<1x32xf32>
    %cst_34 = arith.constant dense<0.000000e+00> : vector<1x32xf32>
    %65 = tpu.matmul %58, %61, %cst_34 {dimension_numbers = #tpu.dot_dimension_numbers<[1], [0], [0], [1], [0, 0, 1, 1], [], []>} : vector<1x32xf32>, vector<32x32xf32>, vector<1x32xf32> -> vector<1x32xf32>
    %66 = arith.addf %65, %64 : vector<1x32xf32>
    %67 = tpu.concatenate %21, %36, %51, %66, %6 in 0 : vector<1x32xf32>, vector<1x32xf32>, vector<1x32xf32>, vector<1x32xf32>, vector<1x32xf32> -> vector<5x32xf32>
    %c0_35 = arith.constant 0 : index
    %c0_36 = arith.constant 0 : index
    %68 = vector.load %arg7[%c0_35, %c0_36] : memref<32x128xf32, #tpu.memory_space<vmem>>, vector<32x128xf32>
    %cst_37 = arith.constant dense<0.000000e+00> : vector<5x128xf32>
    %69 = tpu.matmul %67, %68, %cst_37 {dimension_numbers = #tpu.dot_dimension_numbers<[1], [0], [0], [1], [0, 0, 1, 1], [], []>} : vector<5x32xf32>, vector<32x128xf32>, vector<5x128xf32> -> vector<5x128xf32>
    %c0_38 = arith.constant 0 : index
    %c0_39 = arith.constant 0 : index
    %70 = vector.load %arg9[%c0_38, %c0_39] : memref<1x128xf32, #tpu.memory_space<vmem>>, vector<1x128xf32>
    %71 = vector.broadcast %70 : vector<1x128xf32> to vector<5x128xf32>
    %72 = arith.addf %69, %71 : vector<5x128xf32>
    %73 = vector.extract_strided_slice %72 {offsets = [4, 0], sizes = [1, 128], strides = [1, 1]} : vector<5x128xf32> to vector<1x128xf32>
    %c0_40 = arith.constant 0 : index
    %c0_41 = arith.constant 0 : index
    %74 = vector.load %arg8[%c0_40, %c0_41] : memref<32x128xf32, #tpu.memory_space<vmem>>, vector<32x128xf32>
    %cst_42 = arith.constant 0.000000e+00 : f32
    %75 = vector.broadcast %cst_42 : f32 to vector<1x32xf32>
    %cst_43 = arith.constant 0.000000e+00 : f32
    %76 = vector.broadcast %cst_43 : f32 to vector<1x32xf32>
    %c0_i32_44 = arith.constant 0 : i32
    %77 = arith.cmpi eq, %4, %c0_i32_44 : i32
    %78 = vector.extract_strided_slice %72 {offsets = [0, 0], sizes = [1, 128], strides = [1, 1]} : vector<5x128xf32> to vector<1x128xf32>
    %79 = arith.select %77, %73, %78 : vector<1x128xf32>
    %cst_45 = arith.constant dense<0.000000e+00> : vector<1x128xf32>
    %80 = tpu.matmul %75, %74, %cst_45 {dimension_numbers = #tpu.dot_dimension_numbers<[1], [0], [0], [1], [0, 0, 1, 1], [], []>} : vector<1x32xf32>, vector<32x128xf32>, vector<1x128xf32> -> vector<1x128xf32>
    %81 = arith.addf %79, %80 : vector<1x128xf32>
    %82 = vector.extract_strided_slice %81 {offsets = [0, 0], sizes = [1, 96], strides = [1, 1]} : vector<1x128xf32> to vector<1x96xf32>
    %83 = arith.negf %82 : vector<1x96xf32>
    %84 = math.exp %83 : vector<1x96xf32>
    %cst_46 = arith.constant 1.000000e+00 : f32
    %85 = vector.broadcast %cst_46 : f32 to vector<1x96xf32>
    %86 = arith.addf %85, %84 : vector<1x96xf32>
    %87 = arith.divf %85, %86 : vector<1x96xf32>
    %88 = vector.extract_strided_slice %87 {offsets = [0, 0], sizes = [1, 32], strides = [1, 1]} : vector<1x96xf32> to vector<1x32xf32>
    %89 = vector.extract_strided_slice %87 {offsets = [0, 32], sizes = [1, 32], strides = [1, 1]} : vector<1x96xf32> to vector<1x32xf32>
    %90 = vector.extract_strided_slice %87 {offsets = [0, 64], sizes = [1, 32], strides = [1, 1]} : vector<1x96xf32> to vector<1x32xf32>
    %91 = vector.extract_strided_slice %81 {offsets = [0, 96], sizes = [1, 32], strides = [1, 1]} : vector<1x128xf32> to vector<1x32xf32>
    %92 = math.tanh %91 : vector<1x32xf32>
    %93 = arith.mulf %89, %76 : vector<1x32xf32>
    %94 = arith.mulf %88, %92 : vector<1x32xf32>
    %95 = arith.addf %93, %94 : vector<1x32xf32>
    %96 = math.tanh %95 : vector<1x32xf32>
    %97 = arith.mulf %90, %96 : vector<1x32xf32>
    %c0_i32_47 = arith.constant 0 : i32
    %98 = arith.cmpi sge, %4, %c0_i32_47 : i32
    %99 = arith.select %98, %95, %76 : vector<1x32xf32>
    %100 = arith.select %98, %97, %75 : vector<1x32xf32>
    %c1_i32 = arith.constant 1 : i32
    %101 = arith.cmpi eq, %4, %c1_i32 : i32
    %102 = vector.extract_strided_slice %72 {offsets = [1, 0], sizes = [1, 128], strides = [1, 1]} : vector<5x128xf32> to vector<1x128xf32>
    %103 = arith.select %101, %73, %102 : vector<1x128xf32>
    %cst_48 = arith.constant dense<0.000000e+00> : vector<1x128xf32>
    %104 = tpu.matmul %100, %74, %cst_48 {dimension_numbers = #tpu.dot_dimension_numbers<[1], [0], [0], [1], [0, 0, 1, 1], [], []>} : vector<1x32xf32>, vector<32x128xf32>, vector<1x128xf32> -> vector<1x128xf32>
    %105 = arith.addf %103, %104 : vector<1x128xf32>
    %106 = vector.extract_strided_slice %105 {offsets = [0, 0], sizes = [1, 96], strides = [1, 1]} : vector<1x128xf32> to vector<1x96xf32>
    %107 = arith.negf %106 : vector<1x96xf32>
    %108 = math.exp %107 : vector<1x96xf32>
    %cst_49 = arith.constant 1.000000e+00 : f32
    %109 = vector.broadcast %cst_49 : f32 to vector<1x96xf32>
    %110 = arith.addf %109, %108 : vector<1x96xf32>
    %111 = arith.divf %109, %110 : vector<1x96xf32>
    %112 = vector.extract_strided_slice %111 {offsets = [0, 0], sizes = [1, 32], strides = [1, 1]} : vector<1x96xf32> to vector<1x32xf32>
    %113 = vector.extract_strided_slice %111 {offsets = [0, 32], sizes = [1, 32], strides = [1, 1]} : vector<1x96xf32> to vector<1x32xf32>
    %114 = vector.extract_strided_slice %111 {offsets = [0, 64], sizes = [1, 32], strides = [1, 1]} : vector<1x96xf32> to vector<1x32xf32>
    %115 = vector.extract_strided_slice %105 {offsets = [0, 96], sizes = [1, 32], strides = [1, 1]} : vector<1x128xf32> to vector<1x32xf32>
    %116 = math.tanh %115 : vector<1x32xf32>
    %117 = arith.mulf %113, %99 : vector<1x32xf32>
    %118 = arith.mulf %112, %116 : vector<1x32xf32>
    %119 = arith.addf %117, %118 : vector<1x32xf32>
    %120 = math.tanh %119 : vector<1x32xf32>
    %121 = arith.mulf %114, %120 : vector<1x32xf32>
    %c1_i32_50 = arith.constant 1 : i32
    %122 = arith.cmpi sge, %4, %c1_i32_50 : i32
    %123 = arith.select %122, %119, %99 : vector<1x32xf32>
    %124 = arith.select %122, %121, %100 : vector<1x32xf32>
    %c2_i32 = arith.constant 2 : i32
    %125 = arith.cmpi eq, %4, %c2_i32 : i32
    %126 = vector.extract_strided_slice %72 {offsets = [2, 0], sizes = [1, 128], strides = [1, 1]} : vector<5x128xf32> to vector<1x128xf32>
    %127 = arith.select %125, %73, %126 : vector<1x128xf32>
    %cst_51 = arith.constant dense<0.000000e+00> : vector<1x128xf32>
    %128 = tpu.matmul %124, %74, %cst_51 {dimension_numbers = #tpu.dot_dimension_numbers<[1], [0], [0], [1], [0, 0, 1, 1], [], []>} : vector<1x32xf32>, vector<32x128xf32>, vector<1x128xf32> -> vector<1x128xf32>
    %129 = arith.addf %127, %128 : vector<1x128xf32>
    %130 = vector.extract_strided_slice %129 {offsets = [0, 0], sizes = [1, 96], strides = [1, 1]} : vector<1x128xf32> to vector<1x96xf32>
    %131 = arith.negf %130 : vector<1x96xf32>
    %132 = math.exp %131 : vector<1x96xf32>
    %cst_52 = arith.constant 1.000000e+00 : f32
    %133 = vector.broadcast %cst_52 : f32 to vector<1x96xf32>
    %134 = arith.addf %133, %132 : vector<1x96xf32>
    %135 = arith.divf %133, %134 : vector<1x96xf32>
    %136 = vector.extract_strided_slice %135 {offsets = [0, 0], sizes = [1, 32], strides = [1, 1]} : vector<1x96xf32> to vector<1x32xf32>
    %137 = vector.extract_strided_slice %135 {offsets = [0, 32], sizes = [1, 32], strides = [1, 1]} : vector<1x96xf32> to vector<1x32xf32>
    %138 = vector.extract_strided_slice %135 {offsets = [0, 64], sizes = [1, 32], strides = [1, 1]} : vector<1x96xf32> to vector<1x32xf32>
    %139 = vector.extract_strided_slice %129 {offsets = [0, 96], sizes = [1, 32], strides = [1, 1]} : vector<1x128xf32> to vector<1x32xf32>
    %140 = math.tanh %139 : vector<1x32xf32>
    %141 = arith.mulf %137, %123 : vector<1x32xf32>
    %142 = arith.mulf %136, %140 : vector<1x32xf32>
    %143 = arith.addf %141, %142 : vector<1x32xf32>
    %144 = math.tanh %143 : vector<1x32xf32>
    %145 = arith.mulf %138, %144 : vector<1x32xf32>
    %c2_i32_53 = arith.constant 2 : i32
    %146 = arith.cmpi sge, %4, %c2_i32_53 : i32
    %147 = arith.select %146, %143, %123 : vector<1x32xf32>
    %148 = arith.select %146, %145, %124 : vector<1x32xf32>
    %c3_i32 = arith.constant 3 : i32
    %149 = arith.cmpi eq, %4, %c3_i32 : i32
    %150 = vector.extract_strided_slice %72 {offsets = [3, 0], sizes = [1, 128], strides = [1, 1]} : vector<5x128xf32> to vector<1x128xf32>
    %151 = arith.select %149, %73, %150 : vector<1x128xf32>
    %cst_54 = arith.constant dense<0.000000e+00> : vector<1x128xf32>
    %152 = tpu.matmul %148, %74, %cst_54 {dimension_numbers = #tpu.dot_dimension_numbers<[1], [0], [0], [1], [0, 0, 1, 1], [], []>} : vector<1x32xf32>, vector<32x128xf32>, vector<1x128xf32> -> vector<1x128xf32>
    %153 = arith.addf %151, %152 : vector<1x128xf32>
    %154 = vector.extract_strided_slice %153 {offsets = [0, 0], sizes = [1, 96], strides = [1, 1]} : vector<1x128xf32> to vector<1x96xf32>
    %155 = arith.negf %154 : vector<1x96xf32>
    %156 = math.exp %155 : vector<1x96xf32>
    %cst_55 = arith.constant 1.000000e+00 : f32
    %157 = vector.broadcast %cst_55 : f32 to vector<1x96xf32>
    %158 = arith.addf %157, %156 : vector<1x96xf32>
    %159 = arith.divf %157, %158 : vector<1x96xf32>
    %160 = vector.extract_strided_slice %159 {offsets = [0, 0], sizes = [1, 32], strides = [1, 1]} : vector<1x96xf32> to vector<1x32xf32>
    %161 = vector.extract_strided_slice %159 {offsets = [0, 32], sizes = [1, 32], strides = [1, 1]} : vector<1x96xf32> to vector<1x32xf32>
    %162 = vector.extract_strided_slice %159 {offsets = [0, 64], sizes = [1, 32], strides = [1, 1]} : vector<1x96xf32> to vector<1x32xf32>
    %163 = vector.extract_strided_slice %153 {offsets = [0, 96], sizes = [1, 32], strides = [1, 1]} : vector<1x128xf32> to vector<1x32xf32>
    %164 = math.tanh %163 : vector<1x32xf32>
    %165 = arith.mulf %161, %147 : vector<1x32xf32>
    %166 = arith.mulf %160, %164 : vector<1x32xf32>
    %167 = arith.addf %165, %166 : vector<1x32xf32>
    %168 = math.tanh %167 : vector<1x32xf32>
    %169 = arith.mulf %162, %168 : vector<1x32xf32>
    %c3_i32_56 = arith.constant 3 : i32
    %170 = arith.cmpi sge, %4, %c3_i32_56 : i32
    %171 = arith.select %170, %167, %147 : vector<1x32xf32>
    %172 = arith.select %170, %169, %148 : vector<1x32xf32>
    %cst_57 = arith.constant dense<0.000000e+00> : vector<1x128xf32>
    %173 = tpu.matmul %172, %74, %cst_57 {dimension_numbers = #tpu.dot_dimension_numbers<[1], [0], [0], [1], [0, 0, 1, 1], [], []>} : vector<1x32xf32>, vector<32x128xf32>, vector<1x128xf32> -> vector<1x128xf32>
    %174 = arith.addf %73, %173 : vector<1x128xf32>
    %175 = vector.extract_strided_slice %174 {offsets = [0, 0], sizes = [1, 96], strides = [1, 1]} : vector<1x128xf32> to vector<1x96xf32>
    %176 = arith.negf %175 : vector<1x96xf32>
    %177 = math.exp %176 : vector<1x96xf32>
    %cst_58 = arith.constant 1.000000e+00 : f32
    %178 = vector.broadcast %cst_58 : f32 to vector<1x96xf32>
    %179 = arith.addf %178, %177 : vector<1x96xf32>
    %180 = arith.divf %178, %179 : vector<1x96xf32>
    %181 = vector.extract_strided_slice %180 {offsets = [0, 0], sizes = [1, 32], strides = [1, 1]} : vector<1x96xf32> to vector<1x32xf32>
    %182 = vector.extract_strided_slice %180 {offsets = [0, 32], sizes = [1, 32], strides = [1, 1]} : vector<1x96xf32> to vector<1x32xf32>
    %183 = vector.extract_strided_slice %174 {offsets = [0, 96], sizes = [1, 32], strides = [1, 1]} : vector<1x128xf32> to vector<1x32xf32>
    %184 = math.tanh %183 : vector<1x32xf32>
    %185 = arith.mulf %182, %171 : vector<1x32xf32>
    %186 = arith.mulf %181, %184 : vector<1x32xf32>
    %187 = arith.addf %185, %186 : vector<1x32xf32>
    %c4_i32 = arith.constant 4 : i32
    %188 = arith.cmpi sge, %4, %c4_i32 : i32
    %189 = arith.select %188, %187, %171 : vector<1x32xf32>
    %190 = arith.index_cast %arg0 : i32 to index
    %c0_59 = arith.constant 0 : index
    %c0_60 = arith.constant 0 : index
    %191 = vector.load %arg11[%190, %c0_59, %c0_60] : memref<8x1x32xf32, #tpu.memory_space<vmem>>, vector<1x1x32xf32>
    %192 = vector.shape_cast %191 : vector<1x1x32xf32> to vector<1x32xf32>
    %193 = vector.shape_cast %189 : vector<1x32xf32> to vector<1x1x32xf32>
    tpu.vector_store %arg11[%190, %c0_59, %c0_60], %193 {strides = array<i32>} : memref<8x1x32xf32, #tpu.memory_space<vmem>>, vector<1x1x32xf32>,
    %c0_61 = arith.constant 0 : index
    %c0_62 = arith.constant 0 : index
    %194 = vector.load %arg10[%c0_61, %c0_62] : memref<1x32xf32, #tpu.memory_space<vmem>>, vector<1x32xf32>
    tpu.vector_store %arg10[%c0_61, %c0_62], %189 {strides = array<i32>} : memref<1x32xf32, #tpu.memory_space<vmem>>, vector<1x32xf32>,
    return
  }
  func.func @transform_0(%arg0: i32, %arg1: memref<8xi32, #tpu.memory_space<smem>>, %arg2: memref<8x4xi32, #tpu.memory_space<smem>>, %arg3: memref<8x4xi32, #tpu.memory_space<smem>>) -> (i32, i32, i32) {
    %c0_i32 = arith.constant 0 : i32
    %c0_i32_0 = arith.constant 0 : i32
    %c0_i32_1 = arith.constant 0 : i32
    return %arg0, %c0_i32, %c0_i32_0 : i32, i32, i32
  }
  func.func @transform_1(%arg0: i32, %arg1: memref<8xi32, #tpu.memory_space<smem>>, %arg2: memref<8x4xi32, #tpu.memory_space<smem>>, %arg3: memref<8x4xi32, #tpu.memory_space<smem>>) -> (i32, i32, i32) {
    %c0_i32 = arith.constant 0 : i32
    %c0_i32_0 = arith.constant 0 : i32
    %c0_i32_1 = arith.constant 0 : i32
    %c0_i32_2 = arith.constant 0 : i32
    return %c0_i32, %c0_i32_0, %c0_i32_1 : i32, i32, i32
  }
  func.func @transform_2(%arg0: i32, %arg1: memref<8xi32, #tpu.memory_space<smem>>, %arg2: memref<8x4xi32, #tpu.memory_space<smem>>, %arg3: memref<8x4xi32, #tpu.memory_space<smem>>) -> (i32, i32, i32) {
    %c0_i32 = arith.constant 0 : i32
    %c0_i32_0 = arith.constant 0 : i32
    %c0_i32_1 = arith.constant 0 : i32
    %c0_i32_2 = arith.constant 0 : i32
    return %c0_i32, %c0_i32_0, %c0_i32_1 : i32, i32, i32
  }
  func.func @transform_3(%arg0: i32, %arg1: memref<8xi32, #tpu.memory_space<smem>>, %arg2: memref<8x4xi32, #tpu.memory_space<smem>>, %arg3: memref<8x4xi32, #tpu.memory_space<smem>>) -> (i32, i32) {
    %c0_i32 = arith.constant 0 : i32
    %c0_i32_0 = arith.constant 0 : i32
    %c0_i32_1 = arith.constant 0 : i32
    return %c0_i32, %c0_i32_0 : i32, i32
  }
  func.func @transform_4(%arg0: i32, %arg1: memref<8xi32, #tpu.memory_space<smem>>, %arg2: memref<8x4xi32, #tpu.memory_space<smem>>, %arg3: memref<8x4xi32, #tpu.memory_space<smem>>) -> (i32, i32) {
    %c0_i32 = arith.constant 0 : i32
    %c0_i32_0 = arith.constant 0 : i32
    %c0_i32_1 = arith.constant 0 : i32
    return %c0_i32, %c0_i32_0 : i32, i32
  }
  func.func @transform_5(%arg0: i32, %arg1: memref<8xi32, #tpu.memory_space<smem>>, %arg2: memref<8x4xi32, #tpu.memory_space<smem>>, %arg3: memref<8x4xi32, #tpu.memory_space<smem>>) -> (i32, i32) {
    %c0_i32 = arith.constant 0 : i32
    %c0_i32_0 = arith.constant 0 : i32
    %c0_i32_1 = arith.constant 0 : i32
    return %c0_i32, %c0_i32_0 : i32, i32
  }
  func.func @transform_6(%arg0: i32, %arg1: memref<8xi32, #tpu.memory_space<smem>>, %arg2: memref<8x4xi32, #tpu.memory_space<smem>>, %arg3: memref<8x4xi32, #tpu.memory_space<smem>>) -> (i32, i32) {
    %c0_i32 = arith.constant 0 : i32
    %c0_i32_0 = arith.constant 0 : i32
    %c0_i32_1 = arith.constant 0 : i32
    return %c0_i32, %c0_i32_0 : i32, i32
  }
}

</mosaic_0001>

<llo_original>
// kernel: fwd.1
$region0: #{fwd.1}
  #allocation0 [shape = 'u32[]', space=smem, size = 0x4, offset = 0x4, fixed_abs, tag = 'smem constant byte address 0x4 - core index']
  #allocation1 [shape = 'u32[144,128]{1,0:T(1,128)}', space=vmem, size = 0x12000, scoped, tag = 'internal scratch']
  #allocation2 [shape = 'f32[8,1,32]{2,1,0:T(1,128)}', space=vmem, size = 0x1000, scoped, tag = 'scratch operand']
  #allocation3 [shape = 's32[1]{0}', space=sflag, size = 0x4, scoped, tag = 'scoped memory for fwd.1']
  #allocation4 [shape = 'u8[512]{0}', space=smem, size = 0x200, scoped, tag = 'prefetched SMEM operand 0']
  #allocation5 [shape = 'u8[4096]{0}', space=smem, size = 0x1000, scoped, tag = 'prefetched SMEM operand 1']
  #allocation6 [shape = 'u8[4096]{0}', space=smem, size = 0x1000, scoped, tag = 'prefetched SMEM operand 2']
  %s0 = inlined_call_operand.vmem [shape: s32[8], index: 0, kind: input, shape index: {}]
  %s1 = inlined_call_operand.vmem [shape: s32[8,4], index: 1, kind: input, shape index: {}]
  %s2 = inlined_call_operand.vmem [shape: s32[8,4], index: 2, kind: input, shape index: {}]
  %s3 = inlined_call_operand.hbm [shape: f32[8,1,32], index: 3, kind: input, shape index: {}]
  %s4 = inlined_call_operand.hbm [shape: f32[4,32,32], index: 4, kind: input, shape index: {}]
  %s5 = inlined_call_operand.hbm [shape: f32[4,1,32], index: 5, kind: input, shape index: {}]
  %s6 = inlined_call_operand.vmem [shape: f32[32,128], index: 6, kind: input, shape index: {}]
  %s7 = inlined_call_operand.hbm [shape: f32[32,128], index: 7, kind: input, shape index: {}]
  %s8 = inlined_call_operand.vmem [shape: f32[1,128], index: 8, kind: input, shape index: {}]
  %s9 = inlined_call_operand.hbm [shape: f32[1,32], index: 9, kind: output, shape index: {}]
  %s10 = sld [smem:[#allocation0]]
  $region77: #{fwd.1} parent=0
    _
  %s12 = ssub.s32 1, %s10
  %s13 = scalar_select 0, %s12, %s10
  %s14 = sshll.u32 %s0, 4
  %s15 = int_to_ptr.vmem [resolvable:$true] %s14
  %17 = dma.vmem_to_smem %s15, 16, [#allocation4], [#allocation3]
  %s18 = sshll.u32 %s1, 4
  %s19 = int_to_ptr.vmem [resolvable:$true] %s18
  %21 = dma.vmem_to_smem %s19, 128, [#allocation5], [#allocation3]
  %s22 = sshll.u32 %s2, 4
  %s23 = int_to_ptr.vmem [resolvable:$true] %s22
  %25 = dma.vmem_to_smem %s23, 128, [#allocation6], [#allocation3]
  %26 = dma.done [#allocation3], 272
  %27 = sfence
  $region1: #{fwd.1} parent=0
    #allocation7 [shape = 'u8[1024]{0}', space=vmem, size = 0x400, scoped, tag = 'input window, operand 3']
    #allocation8 [shape = 's32[2]{0}', space=sflag, size = 0x8, scoped, tag = 'scoped memory for fwd.1']
    #allocation9 [shape = 's32[2]{0}', space=sflag, size = 0x8, scoped, tag = 'scoped memory for fwd.1']
    #allocation10 [shape = 'u8[65536]{0}', space=vmem, size = 0x10000, scoped, tag = 'input window, operand 4, single buffered']
    #allocation11 [shape = 's32[1]{0}', space=sflag, size = 0x4, scoped, tag = 'scoped memory for fwd.1']
    #allocation12 [shape = 'u8[2048]{0}', space=vmem, size = 0x800, scoped, tag = 'input window, operand 5, single buffered']
    #allocation13 [shape = 'u8[16384]{0}', space=vmem, size = 0x4000, scoped, tag = 'input window, operand 7, single buffered']
    #allocation14 [shape = 's32[1]{0}', space=sflag, size = 0x4, scoped, tag = 'scoped memory for fwd.1']
    #allocation15 [shape = 'u8[512]{0}', space=vmem, size = 0x400, scoped, tag = 'output window, operand 0, single buffered']
    %28 = vsyncpa [#allocation8], 0
    %s29 = scalar_lea.sflag [#allocation8], 1
    %30 = vsyncpa %s29, 0
    %31 = vsyncpa [#allocation11], 0
    %32 = vsyncpa [#allocation14], 0
    %33 = vsyncpa [#allocation9], 0
    loop: start=0, step=1, limit=10
    $region2: #{fwd.1} parent=1 // loop_pre_header
      _
    $region3: #{fwd.1} parent=1 // loop_header
      %s35 = sphi 0, %s39
      %p36 = scmp.ge.s32.totalorder %s35, 10
      %s45 = sphi 0, %s47
      %s48 = sphi 0, %s45
      %s49 = sphi 0, %s48
      %s65 = sphi 0, %s49
      %s69 = sphi 0, %s69
      %s71 = sphi 0, %s69
      %s72 = sphi 0, %s71
      %s86 = sphi 0, %s72
      %s90 = sphi 0, %s90
      %s92 = sphi 0, %s90
      %s93 = sphi 0, %s92
      %s107 = sphi 0, %s93
      %s111 = sphi 0, %s111
      %s113 = sphi 0, %s111
      %s114 = sphi 0, %s113
      %s128 = sphi 0, %s114
      %s132 = sphi 0, %s132
      %s134 = sphi 0, %s132
      %s135 = sphi 0, %s134
      %s149 = sphi 0, %s135
      %s153 = sphi 0, %s153
      %s155 = sphi 0, %s153
      %s156 = sphi 0, %s155
      %s170 = sphi 0, %s156
      %s174 = sphi 0, %s174
      %s176 = sphi 0, %s174
      %s177 = sphi 0, %s176
      %s191 = sphi 0, %s177
    $region4: #{fwd.1} parent=1 // loop_header_branch
      %38 = sbr.rel (%p36) target = $region8
    $region5: #{fwd.1} parent=1 // loop_body
      %s40 = ssub.s32 %s35, 1
      %s41 = ssub.s32 %s35, 2
      %s42 = sadd.s32 %s35, 1
      %s43 = ssub.s32 %s35, %s42
      %p44 = scmp.eq.s32.totalorder %s43, 0
      %s46 = sadd.s32 %s45, 1
      %s47 = scalar_select %p44, %s45, %s46
      %p50 = pneg %p44
      %p51 = scmp.eq.s32.totalorder %s35, 7
      %p52 = por %p50, %p51
      %p53 = scmp.ne.s32.totalorder %s45, %s48
      %p54 = scmp.eq.s32.totalorder %s35, 0
      %p55 = por %p53, %p54
      %p56 = scmp.ne.s32.totalorder %s45, %s48
      %p57 = scmp.eq.s32.totalorder %s40, 7
      %p58 = por %p56, %p57
      %p59 = scmp.ne.s32.totalorder %s48, %s49
      %p60 = scmp.eq.s32.totalorder %s40, 0
      %p61 = por %p59, %p60
      %p62 = scmp.ne.s32.totalorder %s48, %s49
      %p63 = scmp.eq.s32.totalorder %s41, 7
      %p64 = por %p62, %p63
      %p66 = scmp.ne.s32.totalorder %s49, %s65
      %p67 = scmp.eq.s32.totalorder %s41, 0
      %p68 = por %p66, %p67
      %s70 = sadd.s32 %s69, 1
      %p73 = scmp.eq.s32.totalorder %s35, 7
      %p74 = scmp.ne.s32.totalorder %s69, %s71
      %p75 = scmp.eq.s32.totalorder %s35, 0
      %p76 = por %p74, %p75
      %p77 = scmp.ne.s32.totalorder %s69, %s71
      %p78 = scmp.eq.s32.totalorder %s40, 7
      %p79 = por %p77, %p78
      %p80 = scmp.ne.s32.totalorder %s71, %s72
      %p81 = scmp.eq.s32.totalorder %s40, 0
      %p82 = por %p80, %p81
      %p83 = scmp.ne.s32.totalorder %s71, %s72
      %p84 = scmp.eq.s32.totalorder %s41, 7
      %p85 = por %p83, %p84
      %p87 = scmp.ne.s32.totalorder %s72, %s86
      %p88 = scmp.eq.s32.totalorder %s41, 0
      %p89 = por %p87, %p88
      %s91 = sadd.s32 %s90, 1
      %p94 = scmp.eq.s32.totalorder %s35, 7
      %p95 = scmp.ne.s32.totalorder %s90, %s92
      %p96 = scmp.eq.s32.totalorder %s35, 0
      %p97 = por %p95, %p96
      %p98 = scmp.ne.s32.totalorder %s90, %s92
      %p99 = scmp.eq.s32.totalorder %s40, 7
      %p100 = por %p98, %p99
      %p101 = scmp.ne.s32.totalorder %s92, %s93
      %p102 = scmp.eq.s32.totalorder %s40, 0
      %p103 = por %p101, %p102
      %p104 = scmp.ne.s32.totalorder %s92, %s93
      %p105 = scmp.eq.s32.totalorder %s41, 7
      %p106 = por %p104, %p105
      %p108 = scmp.ne.s32.totalorder %s93, %s107
      %p109 = scmp.eq.s32.totalorder %s41, 0
      %p110 = por %p108, %p109
      %s112 = sadd.s32 %s111, 1
      %p115 = scmp.eq.s32.totalorder %s35, 7
      %p116 = scmp.ne.s32.totalorder %s111, %s113
      %p117 = scmp.eq.s32.totalorder %s35, 0
      %p118 = por %p116, %p117
      %p119 = scmp.ne.s32.totalorder %s111, %s113
      %p120 = scmp.eq.s32.totalorder %s40, 7
      %p121 = por %p119, %p120
      %p122 = scmp.ne.s32.totalorder %s113, %s114
      %p123 = scmp.eq.s32.totalorder %s40, 0
      %p124 = por %p122, %p123
      %p125 = scmp.ne.s32.totalorder %s113, %s114
      %p126 = scmp.eq.s32.totalorder %s41, 7
      %p127 = por %p125, %p126
      %p129 = scmp.ne.s32.totalorder %s114, %s128
      %p130 = scmp.eq.s32.totalorder %s41, 0
      %p131 = por %p129, %p130
      %s133 = sadd.s32 %s132, 1
      %p136 = scmp.eq.s32.totalorder %s35, 7
      %p137 = scmp.ne.s32.totalorder %s132, %s134
      %p138 = scmp.eq.s32.totalorder %s35, 0
      %p139 = por %p137, %p138
      %p140 = scmp.ne.s32.totalorder %s132, %s134
      %p141 = scmp.eq.s32.totalorder %s40, 7
      %p142 = por %p140, %p141
      %p143 = scmp.ne.s32.totalorder %s134, %s135
      %p144 = scmp.eq.s32.totalorder %s40, 0
      %p145 = por %p143, %p144
      %p146 = scmp.ne.s32.totalorder %s134, %s135
      %p147 = scmp.eq.s32.totalorder %s41, 7
      %p148 = por %p146, %p147
      %p150 = scmp.ne.s32.totalorder %s135, %s149
      %p151 = scmp.eq.s32.totalorder %s41, 0
      %p152 = por %p150, %p151
      %s154 = sadd.s32 %s153, 1
      %p157 = scmp.eq.s32.totalorder %s35, 7
      %p158 = scmp.ne.s32.totalorder %s153, %s155
      %p159 = scmp.eq.s32.totalorder %s35, 0
      %p160 = por %p158, %p159
      %p161 = scmp.ne.s32.totalorder %s153, %s155
      %p162 = scmp.eq.s32.totalorder %s40, 7
      %p163 = por %p161, %p162
      %p164 = scmp.ne.s32.totalorder %s155, %s156
      %p165 = scmp.eq.s32.totalorder %s40, 0
      %p166 = por %p164, %p165
      %p167 = scmp.ne.s32.totalorder %s155, %s156
      %p168 = scmp.eq.s32.totalorder %s41, 7
      %p169 = por %p167, %p168
      %p171 = scmp.ne.s32.totalorder %s156, %s170
      %p172 = scmp.eq.s32.totalorder %s41, 0
      %p173 = por %p171, %p172
      %s175 = sadd.s32 %s174, 1
      %p178 = scmp.eq.s32.totalorder %s35, 7
      %p179 = scmp.ne.s32.totalorder %s174, %s176
      %p180 = scmp.eq.s32.totalorder %s35, 0
      %p181 = por %p179, %p180
      %p182 = scmp.ne.s32.totalorder %s174, %s176
      %p183 = scmp.eq.s32.totalorder %s40, 7
      %p184 = por %p182, %p183
      %p185 = scmp.ne.s32.totalorder %s176, %s177
      %p186 = scmp.eq.s32.totalorder %s40, 0
      %p187 = por %p185, %p186
      %p188 = scmp.ne.s32.totalorder %s176, %s177
      %p189 = scmp.eq.s32.totalorder %s41, 7
      %p190 = por %p188, %p189
      %p192 = scmp.ne.s32.totalorder %s177, %s191
      %p193 = scmp.eq.s32.totalorder %s41, 0
      %p194 = por %p192, %p193
      %p195 = scmp.le.s32.totalorder 1, %s35
      %p196 = scmp.lt.s32.totalorder %s35, 9
      %p197 = pnand %p195, %p196
      %p198 = pneg %p197
      // Predicated region
      $region9: #{fwd.1} parent=5 // pred_check
        _
      $region10: #{fwd.1} parent=5 // pred_check_branch
        %200 = sbr.rel (%p197) target = $region12
      $region11: #{fwd.1} parent=5 // pred_region
        %s201 = ssub.s32 %s35, 1
        // Predicated region
        $region13: #{fwd.1} parent=11 // pred_check
          %p202 = pneg %p82
        $region14: #{fwd.1} parent=11 // pred_check_branch
          %204 = sbr.rel (%p202) target = $region16
        $region15: #{fwd.1} parent=11 // pred_region
          %s206 = ssub.s32 2048, 2048
          %207 = vsyncadd [#allocation11], %s206
          %s208 = sshll.u32 [#allocation10], 4
          %s209 = int_to_ptr.vmem [resolvable:$true] %s208
          %214 = dma.hbm_to_vmem [thread:$0]  %s4, 2048, %s209, [#allocation11], 128, 128, 8
        $region16: #{fwd.1} parent=11 // pred_fallthru
          _
        // Predicated region
        $region17: #{fwd.1} parent=11 // pred_check
          %p215 = pneg %p103
        $region18: #{fwd.1} parent=11 // pred_check_branch
          %217 = sbr.rel (%p215) target = $region20
        $region19: #{fwd.1} parent=11 // pred_region
          %s219 = ssub.s32 64, 64
          %220 = vsyncadd [#allocation11], %s219
          %s221 = sshll.u32 [#allocation12], 4
          %s222 = int_to_ptr.vmem [resolvable:$true] %s221
          %227 = dma.hbm_to_vmem [thread:$0]  %s5, 64, %s222, [#allocation11], 16, 16, 1
        $region20: #{fwd.1} parent=11 // pred_fallthru
          _
        // Predicated region
        $region21: #{fwd.1} parent=11 // pred_check
          %p228 = pneg %p124
        $region22: #{fwd.1} parent=11 // pred_check_branch
          %230 = sbr.rel (%p228) target = $region24
        $region23: #{fwd.1} parent=11 // pred_region
          _
        $region24: #{fwd.1} parent=11 // pred_fallthru
          _
        // Predicated region
        $region25: #{fwd.1} parent=11 // pred_check
          %p231 = pneg %p145
        $region26: #{fwd.1} parent=11 // pred_check_branch
          %233 = sbr.rel (%p231) target = $region28
        $region27: #{fwd.1} parent=11 // pred_region
          %s235 = ssub.s32 512, 512
          %236 = vsyncadd [#allocation14], %s235
          %s237 = sshll.u32 [#allocation13], 4
          %s238 = int_to_ptr.vmem [resolvable:$true] %s237
          %243 = dma.hbm_to_vmem [thread:$0]  %s7, 512, %s238, [#allocation14], 128, 128, 8
        $region28: #{fwd.1} parent=11 // pred_fallthru
          _
        // Predicated region
        $region29: #{fwd.1} parent=11 // pred_check
          %p244 = pneg %p166
        $region30: #{fwd.1} parent=11 // pred_check_branch
          %246 = sbr.rel (%p244) target = $region32
        $region31: #{fwd.1} parent=11 // pred_region
          _
        $region32: #{fwd.1} parent=11 // pred_fallthru
          _
      $region12: #{fwd.1} parent=5 // pred_fallthru
        _
      %p247 = scmp.lt.s32.totalorder %s35, 8
      // Predicated region
      $region33: #{fwd.1} parent=5 // pred_check
        %p248 = pneg %p247
      $region34: #{fwd.1} parent=5 // pred_check_branch
        %250 = sbr.rel (%p248) target = $region36
      $region35: #{fwd.1} parent=5 // pred_region
        // Predicated region
        $region37: #{fwd.1} parent=35 // pred_check
          %p251 = pneg %p55
        $region38: #{fwd.1} parent=35 // pred_check_branch
          %253 = sbr.rel (%p251) target = $region40
        $region39: #{fwd.1} parent=35 // pred_region
          %s254 = sand.u32 %s45, 1
          %s255 = scalar_lea.sflag [#allocation8], %s254
          %s256 = sand.u32 %s45, 1
          %s257 = scalar_lea.vmem [#allocation7], %s256
          %s259 = ssub.s32 16, 16
          %260 = vsyncadd %s255, %s259
          %s261 = smul.addr %s35, 16
          %s262 = scalar_lea.hbm %s3, %s261
          %s264 = sshll.u32 %s257, 4
          %s265 = int_to_ptr.vmem [resolvable:$true] %s264
          %267 = dma.hbm_to_vmem [thread:$0]  %s262, 16, %s265, %s255
        $region40: #{fwd.1} parent=35 // pred_fallthru
          _
      $region36: #{fwd.1} parent=5 // pred_fallthru
        _
      %p268 = scmp.le.s32.totalorder 1, %s35
      %p269 = scmp.lt.s32.totalorder %s35, 9
      %p270 = pnand %p268, %p269
      %p271 = pneg %p270
      // Predicated region
      $region41: #{fwd.1} parent=5 // pred_check
        _
      $region42: #{fwd.1} parent=5 // pred_check_branch
        %273 = sbr.rel (%p270) target = $region44
      $region43: #{fwd.1} parent=5 // pred_region
        %s274 = ssub.s32 %s35, 1
        %s275 = sand.u32 %s48, 1
        %s276 = scalar_lea.sflag [#allocation8], %s275
        %s277 = sand.u32 %s48, 1
        %s278 = scalar_lea.vmem [#allocation7], %s277
        // Predicated region
        $region45: #{fwd.1} parent=43 // pred_check
          %p279 = pneg %p61
        $region46: #{fwd.1} parent=43 // pred_check_branch
          %281 = sbr.rel (%p279) target = $region48
        $region47: #{fwd.1} parent=43 // pred_region
          %282 = dma.done %s276, 16
        $region48: #{fwd.1} parent=43 // pred_fallthru
          _
        // Predicated region
        $region49: #{fwd.1} parent=43 // pred_check
          %p283 = pneg %p82
        $region50: #{fwd.1} parent=43 // pred_check_branch
          %285 = sbr.rel (%p283) target = $region52
        $region51: #{fwd.1} parent=43 // pred_region
          %286 = dma.done [#allocation11], 2048
        $region52: #{fwd.1} parent=43 // pred_fallthru
          _
        // Predicated region
        $region53: #{fwd.1} parent=43 // pred_check
          %p287 = pneg %p103
        $region54: #{fwd.1} parent=43 // pred_check_branch
          %289 = sbr.rel (%p287) target = $region56
        $region55: #{fwd.1} parent=43 // pred_region
          %290 = dma.done [#allocation11], 64
        $region56: #{fwd.1} parent=43 // pred_fallthru
          _
        // Predicated region
        $region57: #{fwd.1} parent=43 // pred_check
          %p291 = pneg %p145
        $region58: #{fwd.1} parent=43 // pred_check_branch
          %293 = sbr.rel (%p291) target = $region60
        $region59: #{fwd.1} parent=43 // pred_region
          %294 = dma.done [#allocation14], 512
        $region60: #{fwd.1} parent=43 // pred_fallthru
          _
        %s295 = sand.u32 %s48, 1
        %s296 = scalar_lea.sflag [#allocation8], %s295
        %s297 = sand.u32 %s48, 1
        %s298 = scalar_lea.vmem [#allocation7], %s297
        %p299 = pneg %p61
        %p300 = pneg %p58
        %p301 = pneg %p82
        %p302 = pneg %p79
        %p303 = pneg %p103
        %p304 = pneg %p100
        %p305 = pneg %p124
        %p306 = pneg %p121
        %p307 = pneg %p145
        %p308 = pneg %p142
        %p309 = pneg %p166
        %p310 = pneg %p163
        %p311 = pneg %p187
        %p312 = pneg %p184
        %p313 = scmp.eq.s32.totalorder %s40, 0
        // Predicated region
        $region61: #{fwd.1} parent=43 // pred_check
          %p314 = pneg %p313
        $region62: #{fwd.1} parent=43 // pred_check_branch
          %316 = sbr.rel (%p314) target = $region64
        $region63: #{fwd.1} parent=43 // pred_region
          %vm317 = vcmask 253952
          %318 = vst.msk [vmem:[#allocation2] sm:$0x1] %vm317, 0.0
          %319 = vst.msk [vmem:[#allocation2 + $0x1] sm:$0x1] %vm317, 0.0
          %320 = vst.msk [vmem:[#allocation2 + $0x2] sm:$0x1] %vm317, 0.0
          %321 = vst.msk [vmem:[#allocation2 + $0x3] sm:$0x1] %vm317, 0.0
          %322 = vst.msk [vmem:[#allocation2 + $0x4] sm:$0x1] %vm317, 0.0
          %323 = vst.msk [vmem:[#allocation2 + $0x5] sm:$0x1] %vm317, 0.0
          %324 = vst.msk [vmem:[#allocation2 + $0x6] sm:$0x1] %vm317, 0.0
          %325 = vst.msk [vmem:[#allocation2 + $0x7] sm:$0x1] %vm317, 0.0
        $region64: #{fwd.1} parent=43 // pred_fallthru
          _
        %s326 = sld [smem:[#allocation4 + %s40]]
        %v327 = vld [vmem:[%s278] sm:$0x1]
        %s328 = smul.u32 %s40, 128
        %s329 = sld [smem:[#allocation5 + %s328]]
        %s330 = sld [smem:[#allocation6 + %s328]]
        %s331 = scalar_lea.vmem [#allocation2], %s329
        %v332 = vld [vmem:[%s331] sm:$0x1]
        %s333 = smul.u32 %s330, 32
        %s334 = scalar_lea.vmem [#allocation10], %s333
        %v335 = vld [vmem:[%s334] sm:$0xff]
        %v336 = vld [vmem:[%s334 + $0x8] sm:$0xff]
        %v337 = vld [vmem:[%s334 + $0x10] sm:$0xff]
        %v338 = vld [vmem:[%s334 + $0x18] sm:$0xff]
        %s339 = scalar_lea.vmem [#allocation12], %s330
        %v340 = vld [vmem:[%s339] sm:$0x1]
        %vm341 = vcmask 261120
        %v343 = vsel %vm341, %v332, 0
        %345 = vmatprep.subr.mxu0 0.0
        %346 = vmatpush1.msra.mxu0 0.0
        %347 = vmatprep.subr.mxu0 0.0
        %348 = vmatpush1.msra.mxu0 0.0
        %349 = vmatprep.subr.mxu0 0.0
        %350 = vmatpush1.msra.mxu0 0.0
        %351 = vmatprep.subr.mxu0 0.0
        %352 = vmatpush1.msra.mxu0 0.0
        %353 = vmatprep.subr.mxu0 0.0
        %354 = vmatpush1.msra.mxu0 0.0
        %355 = vmatprep.subr.mxu0 0.0
        %356 = vmatpush1.msra.mxu0 0.0
        %357 = vmatprep.subr.mxu0 0.0
        %358 = vmatpush1.msra.mxu0 0.0
        %359 = vmatprep.subr.mxu0 0.0
        %360 = vmatpush1.msra.mxu0 0.0
        %361 = vmatprep.subr.mxu0 0.0
        %362 = vmatpush1.msra.mxu0 0.0
        %363 = vmatprep.subr.mxu0 0.0
        %364 = vmatpush1.msra.mxu0 0.0
        %365 = vmatprep.subr.mxu0 0.0
        %366 = vmatpush1.msra.mxu0 0.0
        %367 = vmatprep.subr.mxu0 0.0
        %368 = vmatpush1.msra.mxu0 0.0
        %369 = vmatprep.subr.mxu0 0.0
        %370 = vmatpush1.msra.mxu0 %v338
        %371 = vmatprep.subr.mxu0 0.0
        %372 = vmatpush1.msra.mxu0 %v337
        %373 = vmatprep.subr.mxu0 0.0
        %374 = vmatpush1.msra.mxu0 %v336
        %375 = vmatprep.subr.mxu0 0.0
        %376 = vmatpush1.msra.mxu0 %v335
        %377 = vmatprep.subr.mxu0 0.0
        %378 = vmatpush2.msra.mxu0 0.0
        %379 = vmatprep.subr.mxu0 0.0
        %380 = vmatpush2.msra.mxu0 0.0
        %381 = vmatprep.subr.mxu0 0.0
        %382 = vmatpush2.msra.mxu0 0.0
        %383 = vmatprep.subr.mxu0 0.0
        %384 = vmatpush2.msra.mxu0 0.0
        %385 = vmatprep.subr.mxu0 0.0
        %386 = vmatpush2.msra.mxu0 0.0
        %387 = vmatprep.subr.mxu0 0.0
        %388 = vmatpush2.msra.mxu0 0.0
        %389 = vmatprep.subr.mxu0 0.0
        %390 = vmatpush2.msra.mxu0 0.0
        %391 = vmatprep.subr.mxu0 0.0
        %392 = vmatpush2.msra.mxu0 0.0
        %393 = vmatprep.subr.mxu0 0.0
        %394 = vmatpush2.msra.mxu0 0.0
        %395 = vmatprep.subr.mxu0 0.0
        %396 = vmatpush2.msra.mxu0 0.0
        %397 = vmatprep.subr.mxu0 0.0
        %398 = vmatpush2.msra.mxu0 0.0
        %399 = vmatprep.subr.mxu0 0.0
        %400 = vmatpush2.msra.mxu0 0.0
        %401 = vmatprep.subr.mxu0 0.0
        %402 = vmatpush2.msra.mxu0 0.0
        %403 = vmatprep.subr.mxu0 0.0
        %404 = vmatpush2.msra.mxu0 0.0
        %405 = vmatprep.subr.mxu0 0.0
        %406 = vmatpush2.msra.mxu0 0.0
        %407 = vmatprep.subr.mxu0 0.0
        %408 = vmatpush2.msra.mxu0 0.0
        %409 = vmatprep.mubr.f32.mxu0 0.0
        %410 = vmatmul.mubr.f32.gmra.mxu0 %v343
        %v411 = vpop.f32.mrf.mxu0
        %v412 = vadd.f32 %v340, %v411
        %v413 = vpop.f32.mrf.mxu0
        %414 = vdwg.mxu0
        %s415 = sadd.s32 %s328, 1
        %s416 = sld [smem:[#allocation5 + %s415]]
        %s417 = sld [smem:[#allocation6 + %s415]]
        %s418 = scalar_lea.vmem [#allocation2], %s416
        %v419 = vld [vmem:[%s418] sm:$0x1]
        %s420 = smul.u32 %s417, 32
        %s421 = scalar_lea.vmem [#allocation10], %s420
        %v422 = vld [vmem:[%s421] sm:$0xff]
        %v423 = vld [vmem:[%s421 + $0x8] sm:$0xff]
        %v424 = vld [vmem:[%s421 + $0x10] sm:$0xff]
        %v425 = vld [vmem:[%s421 + $0x18] sm:$0xff]
        %s426 = scalar_lea.vmem [#allocation12], %s417
        %v427 = vld [vmem:[%s426] sm:$0x1]
        %v429 = vsel %vm341, %v419, 0
        %431 = vmatprep.subr.mxu0 0.0
        %432 = vmatpush1.msra.mxu0 0.0
        %433 = vmatprep.subr.mxu0 0.0
        %434 = vmatpush1.msra.mxu0 0.0
        %435 = vmatprep.subr.mxu0 0.0
        %436 = vmatpush1.msra.mxu0 0.0
        %437 = vmatprep.subr.mxu0 0.0
        %438 = vmatpush1.msra.mxu0 0.0
        %439 = vmatprep.subr.mxu0 0.0
        %440 = vmatpush1.msra.mxu0 0.0
        %441 = vmatprep.subr.mxu0 0.0
        %442 = vmatpush1.msra.mxu0 0.0
        %443 = vmatprep.subr.mxu0 0.0
        %444 = vmatpush1.msra.mxu0 0.0
        %445 = vmatprep.subr.mxu0 0.0
        %446 = vmatpush1.msra.mxu0 0.0
        %447 = vmatprep.subr.mxu0 0.0
        %448 = vmatpush1.msra.mxu0 0.0
        %449 = vmatprep.subr.mxu0 0.0
        %450 = vmatpush1.msra.mxu0 0.0
        %451 = vmatprep.subr.mxu0 0.0
        %452 = vmatpush1.msra.mxu0 0.0
        %453 = vmatprep.subr.mxu0 0.0
        %454 = vmatpush1.msra.mxu0 0.0
        %455 = vmatprep.subr.mxu0 0.0
        %456 = vmatpush1.msra.mxu0 %v425
        %457 = vmatprep.subr.mxu0 0.0
        %458 = vmatpush1.msra.mxu0 %v424
        %459 = vmatprep.subr.mxu0 0.0
        %460 = vmatpush1.msra.mxu0 %v423
        %461 = vmatprep.subr.mxu0 0.0
        %462 = vmatpush1.msra.mxu0 %v422
        %463 = vmatprep.subr.mxu0 0.0
        %464 = vmatpush2.msra.mxu0 0.0
        %465 = vmatprep.subr.mxu0 0.0
        %466 = vmatpush2.msra.mxu0 0.0
        %467 = vmatprep.subr.mxu0 0.0
        %468 = vmatpush2.msra.mxu0 0.0
        %469 = vmatprep.subr.mxu0 0.0
        %470 = vmatpush2.msra.mxu0 0.0
        %471 = vmatprep.subr.mxu0 0.0
        %472 = vmatpush2.msra.mxu0 0.0
        %473 = vmatprep.subr.mxu0 0.0
        %474 = vmatpush2.msra.mxu0 0.0
        %475 = vmatprep.subr.mxu0 0.0
        %476 = vmatpush2.msra.mxu0 0.0
        %477 = vmatprep.subr.mxu0 0.0
        %478 = vmatpush2.msra.mxu0 0.0
        %479 = vmatprep.subr.mxu0 0.0
        %480 = vmatpush2.msra.mxu0 0.0
        %481 = vmatprep.subr.mxu0 0.0
        %482 = vmatpush2.msra.mxu0 0.0
        %483 = vmatprep.subr.mxu0 0.0
        %484 = vmatpush2.msra.mxu0 0.0
        %485 = vmatprep.subr.mxu0 0.0
        %486 = vmatpush2.msra.mxu0 0.0
        %487 = vmatprep.subr.mxu0 0.0
        %488 = vmatpush2.msra.mxu0 0.0
        %489 = vmatprep.subr.mxu0 0.0
        %490 = vmatpush2.msra.mxu0 0.0
        %491 = vmatprep.subr.mxu0 0.0
        %492 = vmatpush2.msra.mxu0 0.0
        %493 = vmatprep.subr.mxu0 0.0
        %494 = vmatpush2.msra.mxu0 0.0
        %495 = vmatprep.mubr.f32.mxu0 0.0
        %496 = vmatmul.mubr.f32.gmra.mxu0 %v429
        %v497 = vpop.f32.mrf.mxu0
        %v498 = vadd.f32 %v427, %v497
        %v499 = vpop.f32.mrf.mxu0
        %500 = vdwg.mxu0
        %s501 = sadd.s32 %s328, 2
        %s502 = sld [smem:[#allocation5 + %s501]]
        %s503 = sld [smem:[#allocation6 + %s501]]
        %s504 = scalar_lea.vmem [#allocation2], %s502
        %v505 = vld [vmem:[%s504] sm:$0x1]
        %s506 = smul.u32 %s503, 32
        %s507 = scalar_lea.vmem [#allocation10], %s506
        %v508 = vld [vmem:[%s507] sm:$0xff]
        %v509 = vld [vmem:[%s507 + $0x8] sm:$0xff]
        %v510 = vld [vmem:[%s507 + $0x10] sm:$0xff]
        %v511 = vld [vmem:[%s507 + $0x18] sm:$0xff]
        %s512 = scalar_lea.vmem [#allocation12], %s503
        %v513 = vld [vmem:[%s512] sm:$0x1]
        %v515 = vsel %vm341, %v505, 0
        %517 = vmatprep.subr.mxu0 0.0
        %518 = vmatpush1.msra.mxu0 0.0
        %519 = vmatprep.subr.mxu0 0.0
        %520 = vmatpush1.msra.mxu0 0.0
        %521 = vmatprep.subr.mxu0 0.0
        %522 = vmatpush1.msra.mxu0 0.0
        %523 = vmatprep.subr.mxu0 0.0
        %524 = vmatpush1.msra.mxu0 0.0
        %525 = vmatprep.subr.mxu0 0.0
        %526 = vmatpush1.msra.mxu0 0.0
        %527 = vmatprep.subr.mxu0 0.0
        %528 = vmatpush1.msra.mxu0 0.0
        %529 = vmatprep.subr.mxu0 0.0
        %530 = vmatpush1.msra.mxu0 0.0
        %531 = vmatprep.subr.mxu0 0.0
        %532 = vmatpush1.msra.mxu0 0.0
        %533 = vmatprep.subr.mxu0 0.0
        %534 = vmatpush1.msra.mxu0 0.0
        %535 = vmatprep.subr.mxu0 0.0
        %536 = vmatpush1.msra.mxu0 0.0
        %537 = vmatprep.subr.mxu0 0.0
        %538 = vmatpush1.msra.mxu0 0.0
        %539 = vmatprep.subr.mxu0 0.0
        %540 = vmatpush1.msra.mxu0 0.0
        %541 = vmatprep.subr.mxu0 0.0
        %542 = vmatpush1.msra.mxu0 %v511
        %543 = vmatprep.subr.mxu0 0.0
        %544 = vmatpush1.msra.mxu0 %v510
        %545 = vmatprep.subr.mxu0 0.0
        %546 = vmatpush1.msra.mxu0 %v509
        %547 = vmatprep.subr.mxu0 0.0
        %548 = vmatpush1.msra.mxu0 %v508
        %549 = vmatprep.subr.mxu0 0.0
        %550 = vmatpush2.msra.mxu0 0.0
        %551 = vmatprep.subr.mxu0 0.0
        %552 = vmatpush2.msra.mxu0 0.0
        %553 = vmatprep.subr.mxu0 0.0
        %554 = vmatpush2.msra.mxu0 0.0
        %555 = vmatprep.subr.mxu0 0.0
        %556 = vmatpush2.msra.mxu0 0.0
        %557 = vmatprep.subr.mxu0 0.0
        %558 = vmatpush2.msra.mxu0 0.0
        %559 = vmatprep.subr.mxu0 0.0
        %560 = vmatpush2.msra.mxu0 0.0
        %561 = vmatprep.subr.mxu0 0.0
        %562 = vmatpush2.msra.mxu0 0.0
        %563 = vmatprep.subr.mxu0 0.0
        %564 = vmatpush2.msra.mxu0 0.0
        %565 = vmatprep.subr.mxu0 0.0
        %566 = vmatpush2.msra.mxu0 0.0
        %567 = vmatprep.subr.mxu0 0.0
        %568 = vmatpush2.msra.mxu0 0.0
        %569 = vmatprep.subr.mxu0 0.0
        %570 = vmatpush2.msra.mxu0 0.0
        %571 = vmatprep.subr.mxu0 0.0
        %572 = vmatpush2.msra.mxu0 0.0
        %573 = vmatprep.subr.mxu0 0.0
        %574 = vmatpush2.msra.mxu0 0.0
        %575 = vmatprep.subr.mxu0 0.0
        %576 = vmatpush2.msra.mxu0 0.0
        %577 = vmatprep.subr.mxu0 0.0
        %578 = vmatpush2.msra.mxu0 0.0
        %579 = vmatprep.subr.mxu0 0.0
        %580 = vmatpush2.msra.mxu0 0.0
        %581 = vmatprep.mubr.f32.mxu0 0.0
        %582 = vmatmul.mubr.f32.gmra.mxu0 %v515
        %v583 = vpop.f32.mrf.mxu0
        %v584 = vadd.f32 %v513, %v583
        %v585 = vpop.f32.mrf.mxu0
        %586 = vdwg.mxu0
        %s587 = sadd.s32 %s328, 3
        %s588 = sld [smem:[#allocation5 + %s587]]
        %s589 = sld [smem:[#allocation6 + %s587]]
        %s590 = scalar_lea.vmem [#allocation2], %s588
        %v591 = vld [vmem:[%s590] sm:$0x1]
        %s592 = smul.u32 %s589, 32
        %s593 = scalar_lea.vmem [#allocation10], %s592
        %v594 = vld [vmem:[%s593] sm:$0xff]
        %v595 = vld [vmem:[%s593 + $0x8] sm:$0xff]
        %v596 = vld [vmem:[%s593 + $0x10] sm:$0xff]
        %v597 = vld [vmem:[%s593 + $0x18] sm:$0xff]
        %s598 = scalar_lea.vmem [#allocation12], %s589
        %v599 = vld [vmem:[%s598] sm:$0x1]
        %v601 = vsel %vm341, %v591, 0
        %603 = vmatprep.subr.mxu0 0.0
        %604 = vmatpush1.msra.mxu0 0.0
        %605 = vmatprep.subr.mxu0 0.0
        %606 = vmatpush1.msra.mxu0 0.0
        %607 = vmatprep.subr.mxu0 0.0
        %608 = vmatpush1.msra.mxu0 0.0
        %609 = vmatprep.subr.mxu0 0.0
        %610 = vmatpush1.msra.mxu0 0.0
        %611 = vmatprep.subr.mxu0 0.0
        %612 = vmatpush1.msra.mxu0 0.0
        %613 = vmatprep.subr.mxu0 0.0
        %614 = vmatpush1.msra.mxu0 0.0
        %615 = vmatprep.subr.mxu0 0.0
        %616 = vmatpush1.msra.mxu0 0.0
        %617 = vmatprep.subr.mxu0 0.0
        %618 = vmatpush1.msra.mxu0 0.0
        %619 = vmatprep.subr.mxu0 0.0
        %620 = vmatpush1.msra.mxu0 0.0
        %621 = vmatprep.subr.mxu0 0.0
        %622 = vmatpush1.msra.mxu0 0.0
        %623 = vmatprep.subr.mxu0 0.0
        %624 = vmatpush1.msra.mxu0 0.0
        %625 = vmatprep.subr.mxu0 0.0
        %626 = vmatpush1.msra.mxu0 0.0
        %627 = vmatprep.subr.mxu0 0.0
        %628 = vmatpush1.msra.mxu0 %v597
        %629 = vmatprep.subr.mxu0 0.0
        %630 = vmatpush1.msra.mxu0 %v596
        %631 = vmatprep.subr.mxu0 0.0
        %632 = vmatpush1.msra.mxu0 %v595
        %633 = vmatprep.subr.mxu0 0.0
        %634 = vmatpush1.msra.mxu0 %v594
        %635 = vmatprep.subr.mxu0 0.0
        %636 = vmatpush2.msra.mxu0 0.0
        %637 = vmatprep.subr.mxu0 0.0
        %638 = vmatpush2.msra.mxu0 0.0
        %639 = vmatprep.subr.mxu0 0.0
        %640 = vmatpush2.msra.mxu0 0.0
        %641 = vmatprep.subr.mxu0 0.0
        %642 = vmatpush2.msra.mxu0 0.0
        %643 = vmatprep.subr.mxu0 0.0
        %644 = vmatpush2.msra.mxu0 0.0
        %645 = vmatprep.subr.mxu0 0.0
        %646 = vmatpush2.msra.mxu0 0.0
        %647 = vmatprep.subr.mxu0 0.0
        %648 = vmatpush2.msra.mxu0 0.0
        %649 = vmatprep.subr.mxu0 0.0
        %650 = vmatpush2.msra.mxu0 0.0
        %651 = vmatprep.subr.mxu0 0.0
        %652 = vmatpush2.msra.mxu0 0.0
        %653 = vmatprep.subr.mxu0 0.0
        %654 = vmatpush2.msra.mxu0 0.0
        %655 = vmatprep.subr.mxu0 0.0
        %656 = vmatpush2.msra.mxu0 0.0
        %657 = vmatprep.subr.mxu0 0.0
        %658 = vmatpush2.msra.mxu0 0.0
        %659 = vmatprep.subr.mxu0 0.0
        %660 = vmatpush2.msra.mxu0 0.0
        %661 = vmatprep.subr.mxu0 0.0
        %662 = vmatpush2.msra.mxu0 0.0
        %663 = vmatprep.subr.mxu0 0.0
        %664 = vmatpush2.msra.mxu0 0.0
        %665 = vmatprep.subr.mxu0 0.0
        %666 = vmatpush2.msra.mxu0 0.0
        %667 = vmatprep.mubr.f32.mxu0 0.0
        %668 = vmatmul.mubr.f32.gmra.mxu0 %v601
        %v669 = vpop.f32.mrf.mxu0
        %v670 = vadd.f32 %v599, %v669
        %v671 = vpop.f32.mrf.mxu0
        %672 = vdwg.mxu0
        %v674 = vrot.slane %v498, 7
        %v677 = vrot.slane %v584, 6
        %v680 = vrot.slane %v670, 5
        %v683 = vlaneseq
        %v684 = vshrl.u32 %v683, 7
        %v685 = vsub.s32 0, %v684
        %v686 = vrot.slane %v327, %v685
        %vm688 = vcmask 1040384
        %v689 = vsel %vm688, %v412, %v674
        %vm690 = vcmask 1041408
        %v691 = vsel %vm690, %v689, %v677
        %vm692 = vcmask 1042432
        %v693 = vsel %vm692, %v691, %v680
        %vm694 = vcmask 1043456
        %v695 = vsel %vm694, %v693, %v686
        %v696 = vld [vmem:[%s6] sm:$0xff]
        %v697 = vld [vmem:[%s6 + $0x8] sm:$0xff]
        %v698 = vld [vmem:[%s6 + $0x10] sm:$0xff]
        %v699 = vld [vmem:[%s6 + $0x18] sm:$0xff]
        %v700 = vld [vmem:[%s8] sm:$0x1]
        %v702 = vlaneseq
        %v703 = vshrl.u32 %v702, 7
        %v704 = vsub.s32 0, %v703
        %v705 = vrot.slane %v700, %v704
        %v708 = vsel %vm341, %v695, 0
        %710 = vmatprep.subr.mxu0 0.0
        %711 = vmatpush1.msra.mxu0 0.0
        %712 = vmatprep.subr.mxu0 0.0
        %713 = vmatpush1.msra.mxu0 0.0
        %714 = vmatprep.subr.mxu0 0.0
        %715 = vmatpush1.msra.mxu0 0.0
        %716 = vmatprep.subr.mxu0 0.0
        %717 = vmatpush1.msra.mxu0 0.0
        %718 = vmatprep.subr.mxu0 0.0
        %719 = vmatpush1.msra.mxu0 0.0
        %720 = vmatprep.subr.mxu0 0.0
        %721 = vmatpush1.msra.mxu0 0.0
        %722 = vmatprep.subr.mxu0 0.0
        %723 = vmatpush1.msra.mxu0 0.0
        %724 = vmatprep.subr.mxu0 0.0
        %725 = vmatpush1.msra.mxu0 0.0
        %726 = vmatprep.subr.mxu0 0.0
        %727 = vmatpush1.msra.mxu0 0.0
        %728 = vmatprep.subr.mxu0 0.0
        %729 = vmatpush1.msra.mxu0 0.0
        %730 = vmatprep.subr.mxu0 0.0
        %731 = vmatpush1.msra.mxu0 0.0
        %732 = vmatprep.subr.mxu0 0.0
        %733 = vmatpush1.msra.mxu0 0.0
        %734 = vmatprep.subr.mxu0 0.0
        %735 = vmatpush1.msra.mxu0 %v699
        %736 = vmatprep.subr.mxu0 0.0
        %737 = vmatpush1.msra.mxu0 %v698
        %738 = vmatprep.subr.mxu0 0.0
        %739 = vmatpush1.msra.mxu0 %v697
        %740 = vmatprep.subr.mxu0 0.0
        %741 = vmatpush1.msra.mxu0 %v696
        %742 = vmatprep.subr.mxu0 0.0
        %743 = vmatpush2.msra.mxu0 0.0
        %744 = vmatprep.subr.mxu0 0.0
        %745 = vmatpush2.msra.mxu0 0.0
        %746 = vmatprep.subr.mxu0 0.0
        %747 = vmatpush2.msra.mxu0 0.0
        %748 = vmatprep.subr.mxu0 0.0
        %749 = vmatpush2.msra.mxu0 0.0
        %750 = vmatprep.subr.mxu0 0.0
        %751 = vmatpush2.msra.mxu0 0.0
        %752 = vmatprep.subr.mxu0 0.0
        %753 = vmatpush2.msra.mxu0 0.0
        %754 = vmatprep.subr.mxu0 0.0
        %755 = vmatpush2.msra.mxu0 0.0
        %756 = vmatprep.subr.mxu0 0.0
        %757 = vmatpush2.msra.mxu0 0.0
        %758 = vmatprep.subr.mxu0 0.0
        %759 = vmatpush2.msra.mxu0 0.0
        %760 = vmatprep.subr.mxu0 0.0
        %761 = vmatpush2.msra.mxu0 0.0
        %762 = vmatprep.subr.mxu0 0.0
        %763 = vmatpush2.msra.mxu0 0.0
        %764 = vmatprep.subr.mxu0 0.0
        %765 = vmatpush2.msra.mxu0 0.0
        %766 = vmatprep.subr.mxu0 0.0
        %767 = vmatpush2.msra.mxu0 0.0
        %768 = vmatprep.subr.mxu0 0.0
        %769 = vmatpush2.msra.mxu0 0.0
        %770 = vmatprep.subr.mxu0 0.0
        %771 = vmatpush2.msra.mxu0 0.0
        %772 = vmatprep.subr.mxu0 0.0
        %773 = vmatpush2.msra.mxu0 0.0
        %774 = vmatprep.mubr.f32.mxu0 0.0
        %775 = vmatmul.mubr.f32.gmra.mxu0 %v708
        %v776 = vpop.f32.mrf.mxu0
        %v777 = vadd.f32 %v705, %v776
        %v778 = vpop.f32.mrf.mxu0
        %779 = vdwg.mxu0
        %v780 = vld [vmem:[#allocation13] sm:$0xff]
        %v781 = vld [vmem:[#allocation13 + $0x8] sm:$0xff]
        %v782 = vld [vmem:[#allocation13 + $0x10] sm:$0xff]
        %v783 = vld [vmem:[#allocation13 + $0x18] sm:$0xff]
        %p784 = scmp.eq.s32.totalorder %s326, 0
        %s785 = scalar_select %p784, 1, 0
        %v786 = vstv %s785
        %vm787 = vcmp.eq.s32.totalorder %v786, 1
        %v789 = vrot.slane %v777, 4
        %v791 = vsel %vm787, %v777, %v789
        %v793 = vsel %vm341, 0.0, 0
        %795 = vmatprep.subr.mxu0 0.0
        %796 = vmatpush1.msra.mxu0 0.0
        %797 = vmatprep.subr.mxu0 0.0
        %798 = vmatpush1.msra.mxu0 0.0
        %799 = vmatprep.subr.mxu0 0.0
        %800 = vmatpush1.msra.mxu0 0.0
        %801 = vmatprep.subr.mxu0 0.0
        %802 = vmatpush1.msra.mxu0 0.0
        %803 = vmatprep.subr.mxu0 0.0
        %804 = vmatpush1.msra.mxu0 0.0
        %805 = vmatprep.subr.mxu0 0.0
        %806 = vmatpush1.msra.mxu0 0.0
        %807 = vmatprep.subr.mxu0 0.0
        %808 = vmatpush1.msra.mxu0 0.0
        %809 = vmatprep.subr.mxu0 0.0
        %810 = vmatpush1.msra.mxu0 0.0
        %811 = vmatprep.subr.mxu0 0.0
        %812 = vmatpush1.msra.mxu0 0.0
        %813 = vmatprep.subr.mxu0 0.0
        %814 = vmatpush1.msra.mxu0 0.0
        %815 = vmatprep.subr.mxu0 0.0
        %816 = vmatpush1.msra.mxu0 0.0
        %817 = vmatprep.subr.mxu0 0.0
        %818 = vmatpush1.msra.mxu0 0.0
        %819 = vmatprep.subr.mxu0 0.0
        %820 = vmatpush1.msra.mxu0 %v783
        %821 = vmatprep.subr.mxu0 0.0
        %822 = vmatpush1.msra.mxu0 %v782
        %823 = vmatprep.subr.mxu0 0.0
        %824 = vmatpush1.msra.mxu0 %v781
        %825 = vmatprep.subr.mxu0 0.0
        %826 = vmatpush1.msra.mxu0 %v780
        %827 = vmatprep.subr.mxu0 0.0
        %828 = vmatpush2.msra.mxu0 0.0
        %829 = vmatprep.subr.mxu0 0.0
        %830 = vmatpush2.msra.mxu0 0.0
        %831 = vmatprep.subr.mxu0 0.0
        %832 = vmatpush2.msra.mxu0 0.0
        %833 = vmatprep.subr.mxu0 0.0
        %834 = vmatpush2.msra.mxu0 0.0
        %835 = vmatprep.subr.mxu0 0.0
        %836 = vmatpush2.msra.mxu0 0.0
        %837 = vmatprep.subr.mxu0 0.0
        %838 = vmatpush2.msra.mxu0 0.0
        %839 = vmatprep.subr.mxu0 0.0
        %840 = vmatpush2.msra.mxu0 0.0
        %841 = vmatprep.subr.mxu0 0.0
        %842 = vmatpush2.msra.mxu0 0.0
        %843 = vmatprep.subr.mxu0 0.0
        %844 = vmatpush2.msra.mxu0 0.0
        %845 = vmatprep.subr.mxu0 0.0
        %846 = vmatpush2.msra.mxu0 0.0
        %847 = vmatprep.subr.mxu0 0.0
        %848 = vmatpush2.msra.mxu0 0.0
        %849 = vmatprep.subr.mxu0 0.0
        %850 = vmatpush2.msra.mxu0 0.0
        %851 = vmatprep.subr.mxu0 0.0
        %852 = vmatpush2.msra.mxu0 0.0
        %853 = vmatprep.subr.mxu0 0.0
        %854 = vmatpush2.msra.mxu0 0.0
        %855 = vmatprep.subr.mxu0 0.0
        %856 = vmatpush2.msra.mxu0 0.0
        %857 = vmatprep.subr.mxu0 0.0
        %858 = vmatpush2.msra.mxu0 0.0
        %859 = vmatprep.mubr.f32.mxu0 0.0
        %860 = vmatmul.mubr.f32.gmra.mxu0 %v793
        %v861 = vpop.f32.mrf.mxu0
        %v862 = vadd.f32 0.0, %v861
        %v863 = vpop.f32.mrf.mxu0
        %864 = vdwg.mxu0
        %v866 = vrot.slane %v862, 4
        %v868 = vadd.f32 %v791, %v866
        %v869 = vxor.u32 %v868, 2147483648
        %v870 = vmul.f32 %v869, 1.442695
        %v871 = vpow.pop %v870
        %v872 = vadd.f32 %v871, 1.0
        %v873 = vrcp.pop %v872
        %v874 = vmul.f32 1.0, %v873
        %v875 = vtanh.pop %v868
        %v876 = vmul.f32 %v874, 0.0
        %878 = vrot.lane.b32.xlu0 %v875, 32
        %v879 = vpop.permute.xlu0 %878
        %v881 = vmul.f32 %v874, %v879
        %883 = vrot.lane.b32.xlu0 %v881, 32
        %v884 = vpop.permute.xlu0 %883
        %v886 = vadd.f32 %v876, %v884
        %v887 = vtanh.pop %v886
        %889 = vrot.lane.b32.xlu0 %v887, 32
        %v890 = vpop.permute.xlu0 %889
        %v892 = vmul.f32 %v874, %v890
        %p893 = scmp.ge.s32.totalorder %s326, 0
        %s894 = scalar_select %p893, 1, 0
        %v895 = vstv %s894
        %vm896 = vcmp.eq.s32.totalorder %v895, 1
        %v897 = vsel %vm896, %v886, 0.0
        %v898 = vsel %vm896, %v892, 0.0
        %p899 = scmp.eq.s32.totalorder %s326, 1
        %s900 = scalar_select %p899, 1, 0
        %v901 = vstv %s900
        %vm902 = vcmp.eq.s32.totalorder %v901, 1
        %v903 = vrot.slane %v777, 5
        %v905 = vsel %vm902, %v777, %v903
        %v907 = vrot.slane %v898, 4
        %908 = vrot.lane.b32.xlu0 %v907, 64
        %v909 = vpop.permute.xlu0 %908
        %v910 = vsel %vm341, %v909, 0
        %912 = vmatprep.subr.mxu0 0.0
        %913 = vmatpush1.msra.mxu0 0.0
        %914 = vmatprep.subr.mxu0 0.0
        %915 = vmatpush1.msra.mxu0 0.0
        %916 = vmatprep.subr.mxu0 0.0
        %917 = vmatpush1.msra.mxu0 0.0
        %918 = vmatprep.subr.mxu0 0.0
        %919 = vmatpush1.msra.mxu0 0.0
        %920 = vmatprep.subr.mxu0 0.0
        %921 = vmatpush1.msra.mxu0 0.0
        %922 = vmatprep.subr.mxu0 0.0
        %923 = vmatpush1.msra.mxu0 0.0
        %924 = vmatprep.subr.mxu0 0.0
        %925 = vmatpush1.msra.mxu0 0.0
        %926 = vmatprep.subr.mxu0 0.0
        %927 = vmatpush1.msra.mxu0 0.0
        %928 = vmatprep.subr.mxu0 0.0
        %929 = vmatpush1.msra.mxu0 0.0
        %930 = vmatprep.subr.mxu0 0.0
        %931 = vmatpush1.msra.mxu0 0.0
        %932 = vmatprep.subr.mxu0 0.0
        %933 = vmatpush1.msra.mxu0 0.0
        %934 = vmatprep.subr.mxu0 0.0
        %935 = vmatpush1.msra.mxu0 0.0
        %936 = vmatprep.subr.mxu0 0.0
        %937 = vmatpush1.msra.mxu0 %v783
        %938 = vmatprep.subr.mxu0 0.0
        %939 = vmatpush1.msra.mxu0 %v782
        %940 = vmatprep.subr.mxu0 0.0
        %941 = vmatpush1.msra.mxu0 %v781
        %942 = vmatprep.subr.mxu0 0.0
        %943 = vmatpush1.msra.mxu0 %v780
        %944 = vmatprep.subr.mxu0 0.0
        %945 = vmatpush2.msra.mxu0 0.0
        %946 = vmatprep.subr.mxu0 0.0
        %947 = vmatpush2.msra.mxu0 0.0
        %948 = vmatprep.subr.mxu0 0.0
        %949 = vmatpush2.msra.mxu0 0.0
        %950 = vmatprep.subr.mxu0 0.0
        %951 = vmatpush2.msra.mxu0 0.0
        %952 = vmatprep.subr.mxu0 0.0
        %953 = vmatpush2.msra.mxu0 0.0
        %954 = vmatprep.subr.mxu0 0.0
        %955 = vmatpush2.msra.mxu0 0.0
        %956 = vmatprep.subr.mxu0 0.0
        %957 = vmatpush2.msra.mxu0 0.0
        %958 = vmatprep.subr.mxu0 0.0
        %959 = vmatpush2.msra.mxu0 0.0
        %960 = vmatprep.subr.mxu0 0.0
        %961 = vmatpush2.msra.mxu0 0.0
        %962 = vmatprep.subr.mxu0 0.0
        %963 = vmatpush2.msra.mxu0 0.0
        %964 = vmatprep.subr.mxu0 0.0
        %965 = vmatpush2.msra.mxu0 0.0
        %966 = vmatprep.subr.mxu0 0.0
        %967 = vmatpush2.msra.mxu0 0.0
        %968 = vmatprep.subr.mxu0 0.0
        %969 = vmatpush2.msra.mxu0 0.0
        %970 = vmatprep.subr.mxu0 0.0
        %971 = vmatpush2.msra.mxu0 0.0
        %972 = vmatprep.subr.mxu0 0.0
        %973 = vmatpush2.msra.mxu0 0.0
        %974 = vmatprep.subr.mxu0 0.0
        %975 = vmatpush2.msra.mxu0 0.0
        %976 = vmatprep.mubr.f32.mxu0 0.0
        %977 = vmatmul.mubr.f32.gmra.mxu0 %v910
        %v978 = vpop.f32.mrf.mxu0
        %v979 = vadd.f32 0.0, %v978
        %v980 = vpop.f32.mrf.mxu0
        %981 = vdwg.mxu0
        %v983 = vrot.slane %v979, 4
        %v985 = vadd.f32 %v905, %v983
        %v986 = vxor.u32 %v985, 2147483648
        %v987 = vmul.f32 %v986, 1.442695
        %v988 = vpow.pop %v987
        %v989 = vadd.f32 %v988, 1.0
        %v990 = vrcp.pop %v989
        %v991 = vmul.f32 1.0, %v990
        %v992 = vtanh.pop %v985
        %v993 = vmul.f32 %v991, %v897
        %995 = vrot.lane.b32.xlu0 %v992, 32
        %v996 = vpop.permute.xlu0 %995
        %v998 = vmul.f32 %v991, %v996
        %1000 = vrot.lane.b32.xlu0 %v998, 32
        %v1001 = vpop.permute.xlu0 %1000
        %v1003 = vadd.f32 %v993, %v1001
        %v1004 = vtanh.pop %v1003
        %1006 = vrot.lane.b32.xlu0 %v1004, 32
        %v1007 = vpop.permute.xlu0 %1006
        %v1009 = vmul.f32 %v991, %v1007
        %p1010 = scmp.ge.s32.totalorder %s326, 1
        %s1011 = scalar_select %p1010, 1, 0
        %v1012 = vstv %s1011
        %vm1013 = vcmp.eq.s32.totalorder %v1012, 1
        %v1014 = vsel %vm1013, %v1003, %v897
        %v1015 = vsel %vm1013, %v1009, %v898
        %p1016 = scmp.eq.s32.totalorder %s326, 2
        %s1017 = scalar_select %p1016, 1, 0
        %v1018 = vstv %s1017
        %vm1019 = vcmp.eq.s32.totalorder %v1018, 1
        %v1020 = vrot.slane %v777, 6
        %v1022 = vsel %vm1019, %v777, %v1020
        %v1024 = vrot.slane %v1015, 4
        %1025 = vrot.lane.b32.xlu0 %v1024, 64
        %v1026 = vpop.permute.xlu0 %1025
        %v1027 = vsel %vm341, %v1026, 0
        %1029 = vmatprep.subr.mxu0 0.0
        %1030 = vmatpush1.msra.mxu0 0.0
        %1031 = vmatprep.subr.mxu0 0.0
        %1032 = vmatpush1.msra.mxu0 0.0
        %1033 = vmatprep.subr.mxu0 0.0
        %1034 = vmatpush1.msra.mxu0 0.0
        %1035 = vmatprep.subr.mxu0 0.0
        %1036 = vmatpush1.msra.mxu0 0.0
        %1037 = vmatprep.subr.mxu0 0.0
        %1038 = vmatpush1.msra.mxu0 0.0
        %1039 = vmatprep.subr.mxu0 0.0
        %1040 = vmatpush1.msra.mxu0 0.0
        %1041 = vmatprep.subr.mxu0 0.0
        %1042 = vmatpush1.msra.mxu0 0.0
        %1043 = vmatprep.subr.mxu0 0.0
        %1044 = vmatpush1.msra.mxu0 0.0
        %1045 = vmatprep.subr.mxu0 0.0
        %1046 = vmatpush1.msra.mxu0 0.0
        %1047 = vmatprep.subr.mxu0 0.0
        %1048 = vmatpush1.msra.mxu0 0.0
        %1049 = vmatprep.subr.mxu0 0.0
        %1050 = vmatpush1.msra.mxu0 0.0
        %1051 = vmatprep.subr.mxu0 0.0
        %1052 = vmatpush1.msra.mxu0 0.0
        %1053 = vmatprep.subr.mxu0 0.0
        %1054 = vmatpush1.msra.mxu0 %v783
        %1055 = vmatprep.subr.mxu0 0.0
        %1056 = vmatpush1.msra.mxu0 %v782
        %1057 = vmatprep.subr.mxu0 0.0
        %1058 = vmatpush1.msra.mxu0 %v781
        %1059 = vmatprep.subr.mxu0 0.0
        %1060 = vmatpush1.msra.mxu0 %v780
        %1061 = vmatprep.subr.mxu0 0.0
        %1062 = vmatpush2.msra.mxu0 0.0
        %1063 = vmatprep.subr.mxu0 0.0
        %1064 = vmatpush2.msra.mxu0 0.0
        %1065 = vmatprep.subr.mxu0 0.0
        %1066 = vmatpush2.msra.mxu0 0.0
        %1067 = vmatprep.subr.mxu0 0.0
        %1068 = vmatpush2.msra.mxu0 0.0
        %1069 = vmatprep.subr.mxu0 0.0
        %1070 = vmatpush2.msra.mxu0 0.0
        %1071 = vmatprep.subr.mxu0 0.0
        %1072 = vmatpush2.msra.mxu0 0.0
        %1073 = vmatprep.subr.mxu0 0.0
        %1074 = vmatpush2.msra.mxu0 0.0
        %1075 = vmatprep.subr.mxu0 0.0
        %1076 = vmatpush2.msra.mxu0 0.0
        %1077 = vmatprep.subr.mxu0 0.0
        %1078 = vmatpush2.msra.mxu0 0.0
        %1079 = vmatprep.subr.mxu0 0.0
        %1080 = vmatpush2.msra.mxu0 0.0
        %1081 = vmatprep.subr.mxu0 0.0
        %1082 = vmatpush2.msra.mxu0 0.0
        %1083 = vmatprep.subr.mxu0 0.0
        %1084 = vmatpush2.msra.mxu0 0.0
        %1085 = vmatprep.subr.mxu0 0.0
        %1086 = vmatpush2.msra.mxu0 0.0
        %1087 = vmatprep.subr.mxu0 0.0
        %1088 = vmatpush2.msra.mxu0 0.0
        %1089 = vmatprep.subr.mxu0 0.0
        %1090 = vmatpush2.msra.mxu0 0.0
        %1091 = vmatprep.subr.mxu0 0.0
        %1092 = vmatpush2.msra.mxu0 0.0
        %1093 = vmatprep.mubr.f32.mxu0 0.0
        %1094 = vmatmul.mubr.f32.gmra.mxu0 %v1027
        %v1095 = vpop.f32.mrf.mxu0
        %v1096 = vadd.f32 0.0, %v1095
        %v1097 = vpop.f32.mrf.mxu0
        %1098 = vdwg.mxu0
        %v1100 = vrot.slane %v1096, 4
        %v1102 = vadd.f32 %v1022, %v1100
        %v1103 = vxor.u32 %v1102, 2147483648
        %v1104 = vmul.f32 %v1103, 1.442695
        %v1105 = vpow.pop %v1104
        %v1106 = vadd.f32 %v1105, 1.0
        %v1107 = vrcp.pop %v1106
        %v1108 = vmul.f32 1.0, %v1107
        %v1109 = vtanh.pop %v1102
        %v1110 = vmul.f32 %v1108, %v1014
        %1112 = vrot.lane.b32.xlu0 %v1109, 32
        %v1113 = vpop.permute.xlu0 %1112
        %v1115 = vmul.f32 %v1108, %v1113
        %1117 = vrot.lane.b32.xlu0 %v1115, 32
        %v1118 = vpop.permute.xlu0 %1117
        %v1120 = vadd.f32 %v1110, %v1118
        %v1121 = vtanh.pop %v1120
        %1123 = vrot.lane.b32.xlu0 %v1121, 32
        %v1124 = vpop.permute.xlu0 %1123
        %v1126 = vmul.f32 %v1108, %v1124
        %p1127 = scmp.ge.s32.totalorder %s326, 2
        %s1128 = scalar_select %p1127, 1, 0
        %v1129 = vstv %s1128
        %vm1130 = vcmp.eq.s32.totalorder %v1129, 1
        %v1131 = vsel %vm1130, %v1120, %v1014
        %v1132 = vsel %vm1130, %v1126, %v1015
        %p1133 = scmp.eq.s32.totalorder %s326, 3
        %s1134 = scalar_select %p1133, 1, 0
        %v1135 = vstv %s1134
        %vm1136 = vcmp.eq.s32.totalorder %v1135, 1
        %v1137 = vrot.slane %v777, 7
        %v1139 = vsel %vm1136, %v777, %v1137
        %v1141 = vrot.slane %v1132, 4
        %1142 = vrot.lane.b32.xlu0 %v1141, 64
        %v1143 = vpop.permute.xlu0 %1142
        %v1144 = vsel %vm341, %v1143, 0
        %1146 = vmatprep.subr.mxu0 0.0
        %1147 = vmatpush1.msra.mxu0 0.0
        %1148 = vmatprep.subr.mxu0 0.0
        %1149 = vmatpush1.msra.mxu0 0.0
        %1150 = vmatprep.subr.mxu0 0.0
        %1151 = vmatpush1.msra.mxu0 0.0
        %1152 = vmatprep.subr.mxu0 0.0
        %1153 = vmatpush1.msra.mxu0 0.0
        %1154 = vmatprep.subr.mxu0 0.0
        %1155 = vmatpush1.msra.mxu0 0.0
        %1156 = vmatprep.subr.mxu0 0.0
        %1157 = vmatpush1.msra.mxu0 0.0
        %1158 = vmatprep.subr.mxu0 0.0
        %1159 = vmatpush1.msra.mxu0 0.0
        %1160 = vmatprep.subr.mxu0 0.0
        %1161 = vmatpush1.msra.mxu0 0.0
        %1162 = vmatprep.subr.mxu0 0.0
        %1163 = vmatpush1.msra.mxu0 0.0
        %1164 = vmatprep.subr.mxu0 0.0
        %1165 = vmatpush1.msra.mxu0 0.0
        %1166 = vmatprep.subr.mxu0 0.0
        %1167 = vmatpush1.msra.mxu0 0.0
        %1168 = vmatprep.subr.mxu0 0.0
        %1169 = vmatpush1.msra.mxu0 0.0
        %1170 = vmatprep.subr.mxu0 0.0
        %1171 = vmatpush1.msra.mxu0 %v783
        %1172 = vmatprep.subr.mxu0 0.0
        %1173 = vmatpush1.msra.mxu0 %v782
        %1174 = vmatprep.subr.mxu0 0.0
        %1175 = vmatpush1.msra.mxu0 %v781
        %1176 = vmatprep.subr.mxu0 0.0
        %1177 = vmatpush1.msra.mxu0 %v780
        %1178 = vmatprep.subr.mxu0 0.0
        %1179 = vmatpush2.msra.mxu0 0.0
        %1180 = vmatprep.subr.mxu0 0.0
        %1181 = vmatpush2.msra.mxu0 0.0
        %1182 = vmatprep.subr.mxu0 0.0
        %1183 = vmatpush2.msra.mxu0 0.0
        %1184 = vmatprep.subr.mxu0 0.0
        %1185 = vmatpush2.msra.mxu0 0.0
        %1186 = vmatprep.subr.mxu0 0.0
        %1187 = vmatpush2.msra.mxu0 0.0
        %1188 = vmatprep.subr.mxu0 0.0
        %1189 = vmatpush2.msra.mxu0 0.0
        %1190 = vmatprep.subr.mxu0 0.0
        %1191 = vmatpush2.msra.mxu0 0.0
        %1192 = vmatprep.subr.mxu0 0.0
        %1193 = vmatpush2.msra.mxu0 0.0
        %1194 = vmatprep.subr.mxu0 0.0
        %1195 = vmatpush2.msra.mxu0 0.0
        %1196 = vmatprep.subr.mxu0 0.0
        %1197 = vmatpush2.msra.mxu0 0.0
        %1198 = vmatprep.subr.mxu0 0.0
        %1199 = vmatpush2.msra.mxu0 0.0
        %1200 = vmatprep.subr.mxu0 0.0
        %1201 = vmatpush2.msra.mxu0 0.0
        %1202 = vmatprep.subr.mxu0 0.0
        %1203 = vmatpush2.msra.mxu0 0.0
        %1204 = vmatprep.subr.mxu0 0.0
        %1205 = vmatpush2.msra.mxu0 0.0
        %1206 = vmatprep.subr.mxu0 0.0
        %1207 = vmatpush2.msra.mxu0 0.0
        %1208 = vmatprep.subr.mxu0 0.0
        %1209 = vmatpush2.msra.mxu0 0.0
        %1210 = vmatprep.mubr.f32.mxu0 0.0
        %1211 = vmatmul.mubr.f32.gmra.mxu0 %v1144
        %v1212 = vpop.f32.mrf.mxu0
        %v1213 = vadd.f32 0.0, %v1212
        %v1214 = vpop.f32.mrf.mxu0
        %1215 = vdwg.mxu0
        %v1217 = vrot.slane %v1213, 4
        %v1219 = vadd.f32 %v1139, %v1217
        %v1220 = vxor.u32 %v1219, 2147483648
        %v1221 = vmul.f32 %v1220, 1.442695
        %v1222 = vpow.pop %v1221
        %v1223 = vadd.f32 %v1222, 1.0
        %v1224 = vrcp.pop %v1223
        %v1225 = vmul.f32 1.0, %v1224
        %v1226 = vtanh.pop %v1219
        %v1227 = vmul.f32 %v1225, %v1131
        %1229 = vrot.lane.b32.xlu0 %v1226, 32
        %v1230 = vpop.permute.xlu0 %1229
        %v1232 = vmul.f32 %v1225, %v1230
        %1234 = vrot.lane.b32.xlu0 %v1232, 32
        %v1235 = vpop.permute.xlu0 %1234
        %v1237 = vadd.f32 %v1227, %v1235
        %v1238 = vtanh.pop %v1237
        %1240 = vrot.lane.b32.xlu0 %v1238, 32
        %v1241 = vpop.permute.xlu0 %1240
        %v1243 = vmul.f32 %v1225, %v1241
        %p1244 = scmp.ge.s32.totalorder %s326, 3
        %s1245 = scalar_select %p1244, 1, 0
        %v1246 = vstv %s1245
        %vm1247 = vcmp.eq.s32.totalorder %v1246, 1
        %v1248 = vsel %vm1247, %v1237, %v1131
        %v1249 = vsel %vm1247, %v1243, %v1132
        %v1251 = vrot.slane %v1249, 4
        %1252 = vrot.lane.b32.xlu0 %v1251, 64
        %v1253 = vpop.permute.xlu0 %1252
        %v1254 = vsel %vm341, %v1253, 0
        %1256 = vmatprep.subr.mxu0 0.0
        %1257 = vmatpush1.msra.mxu0 0.0
        %1258 = vmatprep.subr.mxu0 0.0
        %1259 = vmatpush1.msra.mxu0 0.0
        %1260 = vmatprep.subr.mxu0 0.0
        %1261 = vmatpush1.msra.mxu0 0.0
        %1262 = vmatprep.subr.mxu0 0.0
        %1263 = vmatpush1.msra.mxu0 0.0
        %1264 = vmatprep.subr.mxu0 0.0
        %1265 = vmatpush1.msra.mxu0 0.0
        %1266 = vmatprep.subr.mxu0 0.0
        %1267 = vmatpush1.msra.mxu0 0.0
        %1268 = vmatprep.subr.mxu0 0.0
        %1269 = vmatpush1.msra.mxu0 0.0
        %1270 = vmatprep.subr.mxu0 0.0
        %1271 = vmatpush1.msra.mxu0 0.0
        %1272 = vmatprep.subr.mxu0 0.0
        %1273 = vmatpush1.msra.mxu0 0.0
        %1274 = vmatprep.subr.mxu0 0.0
        %1275 = vmatpush1.msra.mxu0 0.0
        %1276 = vmatprep.subr.mxu0 0.0
        %1277 = vmatpush1.msra.mxu0 0.0
        %1278 = vmatprep.subr.mxu0 0.0
        %1279 = vmatpush1.msra.mxu0 0.0
        %1280 = vmatprep.subr.mxu0 0.0
        %1281 = vmatpush1.msra.mxu0 %v783
        %1282 = vmatprep.subr.mxu0 0.0
        %1283 = vmatpush1.msra.mxu0 %v782
        %1284 = vmatprep.subr.mxu0 0.0
        %1285 = vmatpush1.msra.mxu0 %v781
        %1286 = vmatprep.subr.mxu0 0.0
        %1287 = vmatpush1.msra.mxu0 %v780
        %1288 = vmatprep.subr.mxu0 0.0
        %1289 = vmatpush2.msra.mxu0 0.0
        %1290 = vmatprep.subr.mxu0 0.0
        %1291 = vmatpush2.msra.mxu0 0.0
        %1292 = vmatprep.subr.mxu0 0.0
        %1293 = vmatpush2.msra.mxu0 0.0
        %1294 = vmatprep.subr.mxu0 0.0
        %1295 = vmatpush2.msra.mxu0 0.0
        %1296 = vmatprep.subr.mxu0 0.0
        %1297 = vmatpush2.msra.mxu0 0.0
        %1298 = vmatprep.subr.mxu0 0.0
        %1299 = vmatpush2.msra.mxu0 0.0
        %1300 = vmatprep.subr.mxu0 0.0
        %1301 = vmatpush2.msra.mxu0 0.0
        %1302 = vmatprep.subr.mxu0 0.0
        %1303 = vmatpush2.msra.mxu0 0.0
        %1304 = vmatprep.subr.mxu0 0.0
        %1305 = vmatpush2.msra.mxu0 0.0
        %1306 = vmatprep.subr.mxu0 0.0
        %1307 = vmatpush2.msra.mxu0 0.0
        %1308 = vmatprep.subr.mxu0 0.0
        %1309 = vmatpush2.msra.mxu0 0.0
        %1310 = vmatprep.subr.mxu0 0.0
        %1311 = vmatpush2.msra.mxu0 0.0
        %1312 = vmatprep.subr.mxu0 0.0
        %1313 = vmatpush2.msra.mxu0 0.0
        %1314 = vmatprep.subr.mxu0 0.0
        %1315 = vmatpush2.msra.mxu0 0.0
        %1316 = vmatprep.subr.mxu0 0.0
        %1317 = vmatpush2.msra.mxu0 0.0
        %1318 = vmatprep.subr.mxu0 0.0
        %1319 = vmatpush2.msra.mxu0 0.0
        %1320 = vmatprep.mubr.f32.mxu0 0.0
        %1321 = vmatmul.mubr.f32.gmra.mxu0 %v1254
        %v1322 = vpop.f32.mrf.mxu0
        %v1323 = vadd.f32 0.0, %v1322
        %v1324 = vpop.f32.mrf.mxu0
        %1325 = vdwg.mxu0
        %v1327 = vrot.slane %v1323, 4
        %v1329 = vadd.f32 %v777, %v1327
        %v1330 = vxor.u32 %v1329, 2147483648
        %v1331 = vmul.f32 %v1330, 1.442695
        %v1332 = vpow.pop %v1331
        %v1333 = vadd.f32 %v1332, 1.0
        %v1334 = vrcp.pop %v1333
        %v1335 = vmul.f32 1.0, %v1334
        %v1336 = vtanh.pop %v1329
        %v1337 = vmul.f32 %v1335, %v1248
        %1339 = vrot.lane.b32.xlu0 %v1336, 32
        %v1340 = vpop.permute.xlu0 %1339
        %v1342 = vmul.f32 %v1335, %v1340
        %1344 = vrot.lane.b32.xlu0 %v1342, 32
        %v1345 = vpop.permute.xlu0 %1344
        %v1347 = vadd.f32 %v1337, %v1345
        %p1348 = scmp.ge.s32.totalorder %s326, 4
        %s1349 = scalar_select %p1348, 1, 0
        %v1350 = vstv %s1349
        %vm1351 = vcmp.eq.s32.totalorder %v1350, 1
        %v1352 = vsel %vm1351, %v1347, %v1248
        %1354 = vrot.lane.b32.xlu0 %v1352, 96
        %v1355 = vpop.permute.xlu0 %1354
        %s1357 = scalar_lea.vmem [#allocation2], %s40
        %vm1358 = vcmask 258052
        %1359 = vst.msk [vmem:[%s1357 - $0x4] sm:$0x10] %vm1358, %v1355
        %1360 = vst.msk [vmem:[#allocation15 - $0x4] sm:$0x10] %vm1358, %v1355
        // Predicated region
        $region65: #{fwd.1} parent=43 // pred_check
          %p1361 = pneg %p184
        $region66: #{fwd.1} parent=43 // pred_check_branch
          %1363 = sbr.rel (%p1361) target = $region68
        $region67: #{fwd.1} parent=43 // pred_region
          %s1365 = ssub.s32 16, 16
          %1366 = vsyncadd [#allocation9], %s1365
          %s1368 = sshll.u32 [#allocation15], 4
          %s1369 = int_to_ptr.vmem [resolvable:$true] %s1368
          %1371 = dma.vmem_to_hbm [thread:$0]  %s1369, 16, %s9, [#allocation9]
        $region68: #{fwd.1} parent=43 // pred_fallthru
          _
        // Predicated region
        $region69: #{fwd.1} parent=43 // pred_check
          %p1372 = pneg %p184
        $region70: #{fwd.1} parent=43 // pred_check_branch
          %1374 = sbr.rel (%p1372) target = $region72
        $region71: #{fwd.1} parent=43 // pred_region
          %1375 = dma.done [#allocation9], 16
        $region72: #{fwd.1} parent=43 // pred_fallthru
          _
      $region44: #{fwd.1} parent=5 // pred_fallthru
        _
      %p1376 = scmp.le.s32.totalorder 2, %s35
      // Predicated region
      $region73: #{fwd.1} parent=5 // pred_check
        %p1377 = pneg %p1376
      $region74: #{fwd.1} parent=5 // pred_check_branch
        %1379 = sbr.rel (%p1377) target = $region76
      $region75: #{fwd.1} parent=5 // pred_region
        %s1380 = ssub.s32 %s35, 2
      $region76: #{fwd.1} parent=5 // pred_fallthru
        _
    $region6: #{fwd.1} parent=1 // loop_footer
      %s39 = sadd.s32 1, %s35
    $region7: #{fwd.1} parent=1 // loop_footer_branch
      %34 = sbr.rel target = $region3
    $region8: #{fwd.1} parent=1 // loop_exit
      _
    %1381 = vsyncpa [#allocation8], 1
    %s1382 = scalar_lea.sflag [#allocation8], 1
    %1383 = vsyncpa %s1382, 1
    %1384 = vsyncpa [#allocation11], 1
    %1385 = vsyncpa [#allocation14], 1
    %1386 = vsyncpa [#allocation9], 1
    %s1387 = scalar_lea.sflag [#allocation9], 1
    %1388 = vsyncpa %s1387, 1

</llo_original>
